<compile_context>
chip_gen: v6e
topology: v6e:2x2x1
jax: 0.10.0
libtpu: 0.0.40
codegen_flags: <defaults>
</compile_context>

<pallas_src>
import functools

import jax
import jax.numpy as jnp
from jax.experimental import pallas as pl
from jax.experimental.pallas import tpu as pltpu

EPS = 1e-5  # nn.BatchNorm2d default eps


# ----------------------------------------------------------------------------
# Host-side helpers: interpolation / placement matrix, weight packing.
# ----------------------------------------------------------------------------
def _interp_matrix(n_in: int, n_out: int) -> jnp.ndarray:
    """M[i, p] such that out[i] = sum_p M[i, p] * in[p]  (align_corners=True)."""
    i = jnp.arange(n_out, dtype=jnp.float32)
    if n_out > 1:
        src = i * ((n_in - 1) / (n_out - 1))
    else:
        src = jnp.zeros_like(i)
    i0 = jnp.clip(jnp.floor(src).astype(jnp.int32), 0, n_in - 1)
    i1 = jnp.clip(i0 + 1, 0, n_in - 1)
    frac = src - i0.astype(jnp.float32)
    rows = jnp.arange(n_out)
    m = jnp.zeros((n_out, n_in), jnp.float32)
    m = m.at[rows, i0].add(1.0 - frac)
    m = m.at[rows, i1].add(frac)
    return m


def _upsample_pad_matrix(hin, win, h2, w2):
    """(Hin*Win, H2*W2) matrix: bilinear x2 upsample + centered zero-pad placement."""
    hu, wu = 2 * hin, 2 * win
    a = _interp_matrix(hin, hu)   # (Hu, Hin)
    b = _interp_matrix(win, wu)   # (Wu, Win)
    py0 = (h2 - hu) // 2
    px0 = (w2 - wu) // 2
    a_pad = jnp.zeros((h2, hin), jnp.float32).at[py0:py0 + hu].set(a)
    b_pad = jnp.zeros((w2, win), jnp.float32).at[px0:px0 + wu].set(b)
    # mk[yi*Win+xi, y*W2+x] = a_pad[y, yi] * b_pad[x, xi]
    return jnp.einsum("yp,xq->pqyx", a_pad, b_pad).reshape(hin * win, h2 * w2)


def pack_params(w1_oihw, g1, b1, w2_oihw, g2, b2):
    """OIHW conv weights -> (Cout, 9*Cin) im2col form (tap-major, k = dy*3+dx)."""
    cmid, cin = w1_oihw.shape[:2]
    cout = w2_oihw.shape[0]
    return {
        "w1": jnp.transpose(w1_oihw, (0, 2, 3, 1)).reshape(cmid, 9 * cin).astype(jnp.float32),
        "g1": g1.reshape(-1, 1).astype(jnp.float32),
        "b1": b1.reshape(-1, 1).astype(jnp.float32),
        "w2": jnp.transpose(w2_oihw, (0, 2, 3, 1)).reshape(cout, 9 * cmid).astype(jnp.float32),
        "g2": g2.reshape(-1, 1).astype(jnp.float32),
        "b2": b2.reshape(-1, 1).astype(jnp.float32),
    }


# ----------------------------------------------------------------------------
# In-kernel helpers.
# ----------------------------------------------------------------------------
def _dot_f32(a, b):
    """Precision-robust f32 matmul via bf16 hi/lo split (3 MXU passes, f32 acc).

    Only used in `precise=True` mode for the tight reference check; the fast
    default path uses a single bf16 pass.
    """
    a = a.astype(jnp.float32)
    b = b.astype(jnp.float32)
    a_hi = a.astype(jnp.bfloat16)
    b_hi = b.astype(jnp.bfloat16)
    a_lo = (a - a_hi.astype(jnp.float32)).astype(jnp.bfloat16)
    b_lo = (b - b_hi.astype(jnp.float32)).astype(jnp.bfloat16)
    dot = functools.partial(jnp.dot, preferred_element_type=jnp.float32)
    return dot(a_hi, b_hi) + dot(a_lo, b_hi) + dot(a_hi, b_lo)


def _conv_dot(w, p, precise):
    """Conv matmul: single bf16 MXU pass (default) or hi/lo 3-pass (precise)."""
    if precise:
        return _dot_f32(w, p)
    return jnp.dot(w.astype(jnp.bfloat16), p.astype(jnp.bfloat16),
                   preferred_element_type=jnp.float32)


def _bn_relu(x, g, b, m):
    """PyTorch BatchNorm2d (training mode) + ReLU on a (C, M) f32 slab.

    Single-pass stats: mean = E[x], var = E[x^2] - E[x]^2 (biased), eps=1e-5.
    """
    inv_m = 1.0 / m
    mean = jnp.sum(x, axis=1, keepdims=True) * inv_m          # (C, 1)
    ex2 = jnp.sum(x * x, axis=1, keepdims=True) * inv_m       # (C, 1)
    var = ex2 - mean * mean
    scale = g * jax.lax.rsqrt(var + EPS)                      # (C, 1)
    shift = b - mean * scale
    return jnp.maximum(x * scale + shift, 0.0)


def _im2col(src_ref, dst_ref, c, n_batch, hw, ww, base, mask_l, mask_r):
    """Build the (9*C, N*HW) im2col matrix from per-image flat rows.

    src_ref rows nn*c + ch hold image nn / channel ch flattened row-major at
    lanes [base, base+hw); the halo lanes around it are zero.
    dst[(k*c+ch), nn*hw + y*W + x] = padded_input[ch, nn, y+dy-1, x+dx-1],
    with k = dy*3 + dx.  Vertical padding comes from the zero halo lanes;
    horizontal wrap-around across row boundaries is zeroed by the dx==0 /
    dx==2 masks.  The mask broadcast is hoisted out of the tap loop; the mask
    multiply runs in f32 (v5e VPU has no bf16) and is cast on the store.
    """
    st = dst_ref.dtype
    ml = jnp.broadcast_to(mask_l, (c, hw))                     # hoisted, (C, HW) f32
    mr = jnp.broadcast_to(mask_r, (c, hw))
    for k in range(9):
        dy, dx = k // 3, k % 3
        s = base + (dy - 1) * ww + (dx - 1)
        for nn in range(n_batch):
            patch = src_ref[nn * c:(nn + 1) * c, s:s + hw]     # (C, HW)
            if dx == 0:
                patch = (patch.astype(jnp.float32) * ml).astype(st)
            elif dx == 2:
                patch = (patch.astype(jnp.float32) * mr).astype(st)
            dst_ref[k * c:(k + 1) * c, nn * hw:(nn + 1) * hw] = patch


# ----------------------------------------------------------------------------
# Fused Up.forward kernel (single invocation, everything VMEM resident).
# ----------------------------------------------------------------------------
def _up_kernel(x1_ref, x2_ref, mk_ref, maskl_ref, maskr_ref,
               w1_ref, g1_ref, b1_ref, w2_ref, g2_ref, b2_ref,
               o_ref,
               xflat_ref, patch_ref,
               *, n_batch, c1, c2, cmid, cout, ww, base, lflat, hw, precise):
    f32 = jnp.float32
    st = xflat_ref.dtype                                       # staging dtype
    cin = c1 + c2
    m = n_batch * hw
    mask_l = maskl_ref[...]                                    # (1, HW) f32
    mask_r = maskr_ref[...]

    # ---- 1) bilinear x2 upsample + zero-pad placement: one matmul ----------
    kin = x1_ref.shape[2]
    x1f = x1_ref[...].reshape(n_batch * c1, kin)               # (N*C1, Hin*Win) f32
    if precise:
        # hi/lo split folded into ONE dot against the host-stacked constant
        # [mk_hi; mk_hi; mk_lo]:  x1_hi@mk_hi + x1_lo@mk_hi + x1_hi@mk_lo.
        x1_hi = x1f.astype(jnp.bfloat16)
        x1_lo = (x1f - x1_hi.astype(f32)).astype(jnp.bfloat16)
        lhs = jnp.concatenate([x1_hi, x1_lo, x1_hi], axis=1)   # (N*C1, 3*Hin*Win)
    else:
        lhs = x1f.astype(jnp.bfloat16)                         # (N*C1, Hin*Win)
    u = jnp.dot(lhs, mk_ref[...], preferred_element_type=f32)  # (N*C1, HW) f32

    # ---- 2) assemble concat([x2, up(x1)], channel) as flat rows ------------
    # Zero only the halo strips; the interior is fully overwritten below.
    xflat_ref[:, 0:base] = jnp.zeros((n_batch * cin, base), st)
    xflat_ref[:, base + hw:lflat] = jnp.zeros((n_batch * cin, lflat - base - hw), st)
    for nn in range(n_batch):
        r0 = nn * cin
        xflat_ref[r0:r0 + c2, base:base + hw] = x2_ref[nn].astype(st)
        xflat_ref[r0 + c2:r0 + cin, base:base + hw] = u[nn * c1:(nn + 1) * c1, :].astype(st)

    # ---- 3) conv1 (3x3, pad 1, no bias): im2col + one K=9*Cin matmul -------
    _im2col(xflat_ref, patch_ref, cin, n_batch, hw, ww, base, mask_l, mask_r)
    h1 = _conv_dot(w1_ref[...], patch_ref[...], precise)       # (Cmid, M) f32
    h1 = _bn_relu(h1, g1_ref[...], b1_ref[...], m)

    # ---- 4) hidden staging: ALIAS rows [0, N*Cmid) of xflat_ref ------------
    # (xflat's conv1 data is dead once patch_ref is built; the halo lanes of
    # these rows are still zero from step 2, so only valid lanes are written.)
    for nn in range(n_batch):
        xflat_ref[nn * cmid:(nn + 1) * cmid, base:base + hw] = \
            h1[:, nn * hw:(nn + 1) * hw].astype(st)

    # ---- 5) conv2 + BN + ReLU: ALIAS rows [0, 9*Cmid) of patch_ref ---------
    _im2col(xflat_ref, patch_ref, cmid, n_batch, hw, ww, base, mask_l, mask_r)
    y = _conv_dot(w2_ref[...], patch_ref[0:9 * cmid, :], precise)  # (Cout, M) f32
    y = _bn_relu(y, g2_ref[...], b2_ref[...], m)

    # ---- 6) lane-dense output stores: (Cout, H*W) per image ----------------
    for nn in range(n_batch):
        o_ref[nn] = y[:, nn * hw:(nn + 1) * hw].astype(o_ref.dtype)


def up_forward(x1, x2, params, precise=False):
    """x1, x2 are NCHW.  Returns NCHW output of Up(in_ch, out_ch, bilinear=True)."""
    n, c1, hin, win = x1.shape
    n2, c2, h2, w2 = x2.shape
    assert n2 == n
    assert h2 >= 2 * hin and w2 >= 2 * win
    cin = c1 + c2
    cmid = params["w1"].shape[0]
    cout = params["w2"].shape[0]
    assert cmid <= cin  # required by the scratch aliasing (DoubleConv mid = in//2)
    hw = h2 * w2

    # Host-side constants (tiny): upsample+pad matrix, boundary masks.
    mk = _upsample_pad_matrix(hin, win, h2, w2)                # (Hin*Win, HW) f32
    if precise:
        mk_hi = mk.astype(jnp.bfloat16)
        mk_lo = (mk - mk_hi.astype(jnp.float32)).astype(jnp.bfloat16)
        mk_in = jnp.concatenate([mk_hi, mk_hi, mk_lo], axis=0)  # (3*Hin*Win, HW)
    else:
        mk_in = mk.astype(jnp.bfloat16)                         # (Hin*Win, HW)
    xcoord = jnp.arange(hw, dtype=jnp.int32) % w2
    mask_l = (xcoord != 0).astype(jnp.float32).reshape(1, hw)
    mask_r = (xcoord != w2 - 1).astype(jnp.float32).reshape(1, hw)

    # Per-image flat-row layout: valid pixels at lanes [base, base+hw),
    # zero halo (>= W+1 lanes) on both sides, base kept lane-aligned (128).
    halo = w2 + 1
    base = max(128, ((halo + 127) // 128) * 128)
    lflat = base + hw + base

    x1_r = x1.reshape(n, c1, hin * win).astype(jnp.float32)    # free reshape
    x2_r = x2.reshape(n, c2, hw).astype(jnp.float32)           # free reshape

    st_dtype = jnp.float32 if precise else jnp.bfloat16        # staging/im2col dtype

    kernel = functools.partial(
        _up_kernel, n_batch=n, c1=c1, c2=c2, cmid=cmid, cout=cout,
        ww=w2, base=base, lflat=lflat, hw=hw, precise=precise)

    out = pl.pallas_call(
        kernel,
        out_shape=jax.ShapeDtypeStruct((n, cout, hw), jnp.float32),
        scratch_shapes=[
            # staged concat input; rows [0, n*cmid) reused for hidden staging
            pltpu.VMEM((n * cin, lflat), st_dtype),
            # im2col buffer for conv1; rows [0, 9*cmid) reused for conv2
            pltpu.VMEM((9 * cin, n * hw), st_dtype),
        ],
        compiler_params=pltpu.CompilerParams(vmem_limit_bytes=32 * 1024 * 1024),
    )(x1_r, x2_r, mk_in, mask_l, mask_r,
      params["w1"], params["g1"], params["b1"],
      params["w2"], params["g2"], params["b2"])
    return out.reshape(n, cout, h2, w2)


# ----------------------------------------------------------------------------
# Pure-JAX reference (XLA convolutions, highest precision).
# ----------------------------------------------------------------------------
def _reference_up(x1, x2, w1_oihw, g1, b1, w2_oihw, g2, b2):
    prec = jax.lax.Precision.HIGHEST
    n, c, hin, win = x1.shape
    a = _interp_matrix(hin, 2 * hin)
    bmat = _interp_matrix(win, 2 * win)
    x1u = jnp.einsum("hp,ncpq->nchq", a, x1, precision=prec)
    x1u = jnp.einsum("nchq,wq->nchw", x1u, bmat, precision=prec)
    dy = x2.shape[2] - x1u.shape[2]
    dx = x2.shape[3] - x1u.shape[3]
    x1p = jnp.pad(x1u, ((0, 0), (0, 0),
                        (dy // 2, dy - dy // 2), (dx // 2, dx - dx // 2)))
    x = jnp.concatenate([x2, x1p], axis=1)

    def conv(v, w):
        return jax.lax.conv_general_dilated(
            v, w, (1, 1), ((1, 1), (1, 1)),
            dimension_numbers=("NCHW", "OIHW", "NCHW"), precision=prec)

    def bn_relu(v, g, bb):
        mean = jnp.mean(v, axis=(0, 2, 3), keepdims=True)
        var = jnp.mean(jnp.square(v - mean), axis=(0, 2, 3), keepdims=True)
        y = (v - mean) * jax.lax.rsqrt(var + EPS)
        y = y * g.reshape(1, -1, 1, 1) + bb.reshape(1, -1, 1, 1)
        return jnp.maximum(y, 0.0)

    hmid = bn_relu(conv(x, w1_oihw), g1, b1)
    return bn_relu(conv(hmid, w2_oihw), g2, b2)


if __name__ == "__main__":
    # Shapes consistent with Up(in_channels=16, out_channels=16, bilinear=True):
    # x1: deeper feature map (N, 8, 8, 8), x2: skip connection (N, 8, 16, 16).
    N, C1, H1, W1 = 2, 8, 8, 8
    C2, H2, W2 = 8, 16, 16
    in_channels = C1 + C2            # 16
    out_channels = 16
    mid_channels = in_channels // 2  # 8

    key = jax.random.PRNGKey(0)
    k = jax.random.split(key, 8)
    x1 = jax.random.normal(k[0], (N, C1, H1, W1), jnp.float32)
    x2 = jax.random.normal(k[1], (N, C2, H2, W2), jnp.float32)

    # Deterministic synthetic parameters (PyTorch conv weight layout is OIHW).
    w1_oihw = 0.1 * jax.random.normal(k[2], (mid_channels, in_channels, 3, 3), jnp.float32)
    w2_oihw = 0.1 * jax.random.normal(k[3], (out_channels, mid_channels, 3, 3), jnp.float32)
    g1 = 1.0 + 0.1 * jax.random.normal(k[4], (mid_channels,), jnp.float32)
    b1 = 0.1 * jax.random.normal(k[5], (mid_channels,), jnp.float32)
    g2 = 1.0 + 0.1 * jax.random.normal(k[6], (out_channels,), jnp.float32)
    b2 = 0.1 * jax.random.normal(k[7], (out_channels,), jnp.float32)

    params = pack_params(w1_oihw, g1, b1, w2_oihw, g2, b2)

    ref = jax.block_until_ready(_reference_up(x1, x2, w1_oihw, g1, b1, w2_oihw, g2, b2))

    # Fast default path: bf16 staging + single bf16 MXU pass per matmul.
    fwd_fast = jax.jit(up_forward)
    out_fast = jax.block_until_ready(fwd_fast(x1, x2, params))
    assert out_fast.shape == (N, out_channels, H2, W2), out_fast.shape
    diff_fast = float(jnp.max(jnp.abs(out_fast - ref)))
    assert diff_fast < 1e-1, f"fast-path mismatch vs reference: {diff_fast}"

    # Precise path (f32 staging + hi/lo split matmuls): tight check.
    fwd_prec = jax.jit(functools.partial(up_forward, precise=True))
    out_prec = jax.block_until_ready(fwd_prec(x1, x2, params))
    diff_prec = float(jnp.max(jnp.abs(out_prec - ref)))
    assert diff_prec < 2e-3, f"precise-path mismatch vs reference: {diff_prec}"

    print("KERNEL_OK")
</pallas_src>

<mosaic_0001>
module attributes {stable_mosaic.version = 11 : i64} {
  func.func private @main(%arg0: i32) attributes {dimension_semantics = [#tpu.dimension_semantics<core_parallel>], iteration_bounds = array<i64: 2>, tpu.core_type = #tpu.core_type<sc_scalar_subcore>, window_params = []} {
    return
  }
}

module attributes {stable_mosaic.version = 11 : i64} {
  func.func private @main(%arg0: i32) attributes {dimension_semantics = [#tpu.dimension_semantics<core_parallel>], iteration_bounds = array<i64: 2>, tpu.core_type = #tpu.core_type<sc_scalar_subcore>, window_params = []} {
    return
  }
}

module attributes {stable_mosaic.version = 11 : i64} {
  func.func @_up_kernel(%arg0: memref<2x8x64xf32, #tpu.memory_space<vmem>>, %arg1: memref<2x8x256xf32, #tpu.memory_space<vmem>>, %arg2: memref<64x256xbf16, #tpu.memory_space<vmem>>, %arg3: memref<1x256xf32, #tpu.memory_space<vmem>>, %arg4: memref<1x256xf32, #tpu.memory_space<vmem>>, %arg5: memref<8x144xf32, #tpu.memory_space<vmem>>, %arg6: memref<8x1xf32, #tpu.memory_space<vmem>>, %arg7: memref<8x1xf32, #tpu.memory_space<vmem>>, %arg8: memref<16x72xf32, #tpu.memory_space<vmem>>, %arg9: memref<16x1xf32, #tpu.memory_space<vmem>>, %arg10: memref<16x1xf32, #tpu.memory_space<vmem>>, %arg11: memref<2x16x256xf32, #tpu.memory_space<vmem>>, %arg12: memref<32x512xbf16, #tpu.memory_space<vmem>>, %arg13: memref<144x512xbf16, #tpu.memory_space<vmem>>) attributes {dimension_semantics = [], scalar_prefetch = 0 : i64, scratch_operands = 2 : i64, tpu.core_type = #tpu.core_type<tc>} {
    %c0 = arith.constant 0 : index
    %c0_0 = arith.constant 0 : index
    %0 = vector.load %arg3[%c0, %c0_0] : memref<1x256xf32, #tpu.memory_space<vmem>>, vector<1x256xf32>
    %c0_1 = arith.constant 0 : index
    %c0_2 = arith.constant 0 : index
    %1 = vector.load %arg4[%c0_1, %c0_2] : memref<1x256xf32, #tpu.memory_space<vmem>>, vector<1x256xf32>
    %c0_3 = arith.constant 0 : index
    %c0_4 = arith.constant 0 : index
    %c0_5 = arith.constant 0 : index
    %2 = vector.load %arg0[%c0_3, %c0_4, %c0_5] : memref<2x8x64xf32, #tpu.memory_space<vmem>>, vector<2x8x64xf32>
    %3 = vector.shape_cast %2 : vector<2x8x64xf32> to vector<16x64xf32>
    %4 = arith.truncf %3 : vector<16x64xf32> to vector<16x64xbf16>
    %c0_6 = arith.constant 0 : index
    %c0_7 = arith.constant 0 : index
    %5 = vector.load %arg2[%c0_6, %c0_7] : memref<64x256xbf16, #tpu.memory_space<vmem>>, vector<64x256xbf16>
    %cst = arith.constant dense<0.000000e+00> : vector<16x256xf32>
    %6 = tpu.matmul %4, %5, %cst {dimension_numbers = #tpu.dot_dimension_numbers<[1], [0], [0], [1], [0, 0, 1, 1], [], []>} : vector<16x64xbf16>, vector<64x256xbf16>, vector<16x256xf32> -> vector<16x256xf32>
    %cst_8 = arith.constant 0.000000e+00 : bf16
    %7 = vector.broadcast %cst_8 : bf16 to vector<32x128xbf16>
    %c0_9 = arith.constant 0 : index
    %c0_10 = arith.constant 0 : index
    %8 = vector.load %arg12[%c0_9, %c0_10] : memref<32x512xbf16, #tpu.memory_space<vmem>>, vector<32x128xbf16>
    tpu.vector_store %arg12[%c0_9, %c0_10], %7 {strides = array<i32>} : memref<32x512xbf16, #tpu.memory_space<vmem>>, vector<32x128xbf16>,
    %cst_11 = arith.constant 0.000000e+00 : bf16
    %9 = vector.broadcast %cst_11 : bf16 to vector<32x128xbf16>
    %c0_12 = arith.constant 0 : index
    %c384 = arith.constant 384 : index
    %10 = vector.load %arg12[%c0_12, %c384] : memref<32x512xbf16, #tpu.memory_space<vmem>>, vector<32x128xbf16>
    tpu.vector_store %arg12[%c0_12, %c384], %9 {strides = array<i32>} : memref<32x512xbf16, #tpu.memory_space<vmem>>, vector<32x128xbf16>,
    %c0_13 = arith.constant 0 : index
    %c0_14 = arith.constant 0 : index
    %c0_15 = arith.constant 0 : index
    %11 = vector.load %arg1[%c0_13, %c0_14, %c0_15] : memref<2x8x256xf32, #tpu.memory_space<vmem>>, vector<1x8x256xf32>
    %12 = vector.shape_cast %11 : vector<1x8x256xf32> to vector<8x256xf32>
    %13 = arith.truncf %12 : vector<8x256xf32> to vector<8x256xbf16>
    %c0_16 = arith.constant 0 : index
    %c128 = arith.constant 128 : index
    %14 = vector.load %arg12[%c0_16, %c128] : memref<32x512xbf16, #tpu.memory_space<vmem>>, vector<8x256xbf16>
    tpu.vector_store %arg12[%c0_16, %c128], %13 {strides = array<i32>} : memref<32x512xbf16, #tpu.memory_space<vmem>>, vector<8x256xbf16>,
    %15 = vector.extract_strided_slice %6 {offsets = [0, 0], sizes = [8, 256], strides = [1, 1]} : vector<16x256xf32> to vector<8x256xf32>
    %16 = arith.truncf %15 : vector<8x256xf32> to vector<8x256xbf16>
    %c8 = arith.constant 8 : index
    %c128_17 = arith.constant 128 : index
    %17 = vector.load %arg12[%c8, %c128_17] : memref<32x512xbf16, #tpu.memory_space<vmem>>, vector<8x256xbf16>
    tpu.vector_store %arg12[%c8, %c128_17], %16 {strides = array<i32>} : memref<32x512xbf16, #tpu.memory_space<vmem>>, vector<8x256xbf16>,
    %c1 = arith.constant 1 : index
    %c0_18 = arith.constant 0 : index
    %c0_19 = arith.constant 0 : index
    %18 = vector.load %arg1[%c1, %c0_18, %c0_19] : memref<2x8x256xf32, #tpu.memory_space<vmem>>, vector<1x8x256xf32>
    %19 = vector.shape_cast %18 : vector<1x8x256xf32> to vector<8x256xf32>
    %20 = arith.truncf %19 : vector<8x256xf32> to vector<8x256xbf16>
    %c16 = arith.constant 16 : index
    %c128_20 = arith.constant 128 : index
    %21 = vector.load %arg12[%c16, %c128_20] : memref<32x512xbf16, #tpu.memory_space<vmem>>, vector<8x256xbf16>
    tpu.vector_store %arg12[%c16, %c128_20], %20 {strides = array<i32>} : memref<32x512xbf16, #tpu.memory_space<vmem>>, vector<8x256xbf16>,
    %22 = vector.extract_strided_slice %6 {offsets = [8, 0], sizes = [8, 256], strides = [1, 1]} : vector<16x256xf32> to vector<8x256xf32>
    %23 = arith.truncf %22 : vector<8x256xf32> to vector<8x256xbf16>
    %c24 = arith.constant 24 : index
    %c128_21 = arith.constant 128 : index
    %24 = vector.load %arg12[%c24, %c128_21] : memref<32x512xbf16, #tpu.memory_space<vmem>>, vector<8x256xbf16>
    tpu.vector_store %arg12[%c24, %c128_21], %23 {strides = array<i32>} : memref<32x512xbf16, #tpu.memory_space<vmem>>, vector<8x256xbf16>,
    %25 = vector.shape_cast %0 : vector<1x256xf32> to vector<1x256xf32>
    %26 = vector.broadcast %25 : vector<1x256xf32> to vector<16x256xf32>
    %27 = vector.shape_cast %1 : vector<1x256xf32> to vector<1x256xf32>
    %28 = vector.broadcast %27 : vector<1x256xf32> to vector<16x256xf32>
    %c0_22 = arith.constant 0 : index
    %c111 = arith.constant 111 : index
    %29 = vector.load %arg12[%c0_22, %c111] : memref<32x512xbf16, #tpu.memory_space<vmem>>, vector<16x256xbf16>
    %30 = arith.extf %29 : vector<16x256xbf16> to vector<16x256xf32>
    %31 = arith.mulf %30, %26 : vector<16x256xf32>
    %32 = arith.truncf %31 : vector<16x256xf32> to vector<16x256xbf16>
    %c0_23 = arith.constant 0 : index
    %c0_24 = arith.constant 0 : index
    %33 = vector.load %arg13[%c0_23, %c0_24] : memref<144x512xbf16, #tpu.memory_space<vmem>>, vector<16x256xbf16>
    tpu.vector_store %arg13[%c0_23, %c0_24], %32 {strides = array<i32>} : memref<144x512xbf16, #tpu.memory_space<vmem>>, vector<16x256xbf16>,
    %c16_25 = arith.constant 16 : index
    %c111_26 = arith.constant 111 : index
    %34 = vector.load %arg12[%c16_25, %c111_26] : memref<32x512xbf16, #tpu.memory_space<vmem>>, vector<16x256xbf16>
    %35 = arith.extf %34 : vector<16x256xbf16> to vector<16x256xf32>
    %36 = arith.mulf %35, %26 : vector<16x256xf32>
    %37 = arith.truncf %36 : vector<16x256xf32> to vector<16x256xbf16>
    %c0_27 = arith.constant 0 : index
    %c256 = arith.constant 256 : index
    %38 = vector.load %arg13[%c0_27, %c256] : memref<144x512xbf16, #tpu.memory_space<vmem>>, vector<16x256xbf16>
    tpu.vector_store %arg13[%c0_27, %c256], %37 {strides = array<i32>} : memref<144x512xbf16, #tpu.memory_space<vmem>>, vector<16x256xbf16>,
    %c0_28 = arith.constant 0 : index
    %c112 = arith.constant 112 : index
    %39 = vector.load %arg12[%c0_28, %c112] : memref<32x512xbf16, #tpu.memory_space<vmem>>, vector<16x256xbf16>
    %c16_29 = arith.constant 16 : index
    %c0_30 = arith.constant 0 : index
    %40 = vector.load %arg13[%c16_29, %c0_30] : memref<144x512xbf16, #tpu.memory_space<vmem>>, vector<16x256xbf16>
    tpu.vector_store %arg13[%c16_29, %c0_30], %39 {strides = array<i32>} : memref<144x512xbf16, #tpu.memory_space<vmem>>, vector<16x256xbf16>,
    %c16_31 = arith.constant 16 : index
    %c112_32 = arith.constant 112 : index
    %41 = vector.load %arg12[%c16_31, %c112_32] : memref<32x512xbf16, #tpu.memory_space<vmem>>, vector<16x256xbf16>
    %c16_33 = arith.constant 16 : index
    %c256_34 = arith.constant 256 : index
    %42 = vector.load %arg13[%c16_33, %c256_34] : memref<144x512xbf16, #tpu.memory_space<vmem>>, vector<16x256xbf16>
    tpu.vector_store %arg13[%c16_33, %c256_34], %41 {strides = array<i32>} : memref<144x512xbf16, #tpu.memory_space<vmem>>, vector<16x256xbf16>,
    %c0_35 = arith.constant 0 : index
    %c113 = arith.constant 113 : index
    %43 = vector.load %arg12[%c0_35, %c113] : memref<32x512xbf16, #tpu.memory_space<vmem>>, vector<16x256xbf16>
    %44 = arith.extf %43 : vector<16x256xbf16> to vector<16x256xf32>
    %45 = arith.mulf %44, %28 : vector<16x256xf32>
    %46 = arith.truncf %45 : vector<16x256xf32> to vector<16x256xbf16>
    %c32 = arith.constant 32 : index
    %c0_36 = arith.constant 0 : index
    %47 = vector.load %arg13[%c32, %c0_36] : memref<144x512xbf16, #tpu.memory_space<vmem>>, vector<16x256xbf16>
    tpu.vector_store %arg13[%c32, %c0_36], %46 {strides = array<i32>} : memref<144x512xbf16, #tpu.memory_space<vmem>>, vector<16x256xbf16>,
    %c16_37 = arith.constant 16 : index
    %c113_38 = arith.constant 113 : index
    %48 = vector.load %arg12[%c16_37, %c113_38] : memref<32x512xbf16, #tpu.memory_space<vmem>>, vector<16x256xbf16>
    %49 = arith.extf %48 : vector<16x256xbf16> to vector<16x256xf32>
    %50 = arith.mulf %49, %28 : vector<16x256xf32>
    %51 = arith.truncf %50 : vector<16x256xf32> to vector<16x256xbf16>
    %c32_39 = arith.constant 32 : index
    %c256_40 = arith.constant 256 : index
    %52 = vector.load %arg13[%c32_39, %c256_40] : memref<144x512xbf16, #tpu.memory_space<vmem>>, vector<16x256xbf16>
    tpu.vector_store %arg13[%c32_39, %c256_40], %51 {strides = array<i32>} : memref<144x512xbf16, #tpu.memory_space<vmem>>, vector<16x256xbf16>,
    %c0_41 = arith.constant 0 : index
    %c127 = arith.constant 127 : index
    %53 = vector.load %arg12[%c0_41, %c127] : memref<32x512xbf16, #tpu.memory_space<vmem>>, vector<16x256xbf16>
    %54 = arith.extf %53 : vector<16x256xbf16> to vector<16x256xf32>
    %55 = arith.mulf %54, %26 : vector<16x256xf32>
    %56 = arith.truncf %55 : vector<16x256xf32> to vector<16x256xbf16>
    %c48 = arith.constant 48 : index
    %c0_42 = arith.constant 0 : index
    %57 = vector.load %arg13[%c48, %c0_42] : memref<144x512xbf16, #tpu.memory_space<vmem>>, vector<16x256xbf16>
    tpu.vector_store %arg13[%c48, %c0_42], %56 {strides = array<i32>} : memref<144x512xbf16, #tpu.memory_space<vmem>>, vector<16x256xbf16>,
    %c16_43 = arith.constant 16 : index
    %c127_44 = arith.constant 127 : index
    %58 = vector.load %arg12[%c16_43, %c127_44] : memref<32x512xbf16, #tpu.memory_space<vmem>>, vector<16x256xbf16>
    %59 = arith.extf %58 : vector<16x256xbf16> to vector<16x256xf32>
    %60 = arith.mulf %59, %26 : vector<16x256xf32>
    %61 = arith.truncf %60 : vector<16x256xf32> to vector<16x256xbf16>
    %c48_45 = arith.constant 48 : index
    %c256_46 = arith.constant 256 : index
    %62 = vector.load %arg13[%c48_45, %c256_46] : memref<144x512xbf16, #tpu.memory_space<vmem>>, vector<16x256xbf16>
    tpu.vector_store %arg13[%c48_45, %c256_46], %61 {strides = array<i32>} : memref<144x512xbf16, #tpu.memory_space<vmem>>, vector<16x256xbf16>,
    %c0_47 = arith.constant 0 : index
    %c128_48 = arith.constant 128 : index
    %63 = vector.load %arg12[%c0_47, %c128_48] : memref<32x512xbf16, #tpu.memory_space<vmem>>, vector<16x256xbf16>
    %c64 = arith.constant 64 : index
    %c0_49 = arith.constant 0 : index
    %64 = vector.load %arg13[%c64, %c0_49] : memref<144x512xbf16, #tpu.memory_space<vmem>>, vector<16x256xbf16>
    tpu.vector_store %arg13[%c64, %c0_49], %63 {strides = array<i32>} : memref<144x512xbf16, #tpu.memory_space<vmem>>, vector<16x256xbf16>,
    %c16_50 = arith.constant 16 : index
    %c128_51 = arith.constant 128 : index
    %65 = vector.load %arg12[%c16_50, %c128_51] : memref<32x512xbf16, #tpu.memory_space<vmem>>, vector<16x256xbf16>
    %c64_52 = arith.constant 64 : index
    %c256_53 = arith.constant 256 : index
    %66 = vector.load %arg13[%c64_52, %c256_53] : memref<144x512xbf16, #tpu.memory_space<vmem>>, vector<16x256xbf16>
    tpu.vector_store %arg13[%c64_52, %c256_53], %65 {strides = array<i32>} : memref<144x512xbf16, #tpu.memory_space<vmem>>, vector<16x256xbf16>,
    %c0_54 = arith.constant 0 : index
    %c129 = arith.constant 129 : index
    %67 = vector.load %arg12[%c0_54, %c129] : memref<32x512xbf16, #tpu.memory_space<vmem>>, vector<16x256xbf16>
    %68 = arith.extf %67 : vector<16x256xbf16> to vector<16x256xf32>
    %69 = arith.mulf %68, %28 : vector<16x256xf32>
    %70 = arith.truncf %69 : vector<16x256xf32> to vector<16x256xbf16>
    %c80 = arith.constant 80 : index
    %c0_55 = arith.constant 0 : index
    %71 = vector.load %arg13[%c80, %c0_55] : memref<144x512xbf16, #tpu.memory_space<vmem>>, vector<16x256xbf16>
    tpu.vector_store %arg13[%c80, %c0_55], %70 {strides = array<i32>} : memref<144x512xbf16, #tpu.memory_space<vmem>>, vector<16x256xbf16>,
    %c16_56 = arith.constant 16 : index
    %c129_57 = arith.constant 129 : index
    %72 = vector.load %arg12[%c16_56, %c129_57] : memref<32x512xbf16, #tpu.memory_space<vmem>>, vector<16x256xbf16>
    %73 = arith.extf %72 : vector<16x256xbf16> to vector<16x256xf32>
    %74 = arith.mulf %73, %28 : vector<16x256xf32>
    %75 = arith.truncf %74 : vector<16x256xf32> to vector<16x256xbf16>
    %c80_58 = arith.constant 80 : index
    %c256_59 = arith.constant 256 : index
    %76 = vector.load %arg13[%c80_58, %c256_59] : memref<144x512xbf16, #tpu.memory_space<vmem>>, vector<16x256xbf16>
    tpu.vector_store %arg13[%c80_58, %c256_59], %75 {strides = array<i32>} : memref<144x512xbf16, #tpu.memory_space<vmem>>, vector<16x256xbf16>,
    %c0_60 = arith.constant 0 : index
    %c143 = arith.constant 143 : index
    %77 = vector.load %arg12[%c0_60, %c143] : memref<32x512xbf16, #tpu.memory_space<vmem>>, vector<16x256xbf16>
    %78 = arith.extf %77 : vector<16x256xbf16> to vector<16x256xf32>
    %79 = arith.mulf %78, %26 : vector<16x256xf32>
    %80 = arith.truncf %79 : vector<16x256xf32> to vector<16x256xbf16>
    %c96 = arith.constant 96 : index
    %c0_61 = arith.constant 0 : index
    %81 = vector.load %arg13[%c96, %c0_61] : memref<144x512xbf16, #tpu.memory_space<vmem>>, vector<16x256xbf16>
    tpu.vector_store %arg13[%c96, %c0_61], %80 {strides = array<i32>} : memref<144x512xbf16, #tpu.memory_space<vmem>>, vector<16x256xbf16>,
    %c16_62 = arith.constant 16 : index
    %c143_63 = arith.constant 143 : index
    %82 = vector.load %arg12[%c16_62, %c143_63] : memref<32x512xbf16, #tpu.memory_space<vmem>>, vector<16x256xbf16>
    %83 = arith.extf %82 : vector<16x256xbf16> to vector<16x256xf32>
    %84 = arith.mulf %83, %26 : vector<16x256xf32>
    %85 = arith.truncf %84 : vector<16x256xf32> to vector<16x256xbf16>
    %c96_64 = arith.constant 96 : index
    %c256_65 = arith.constant 256 : index
    %86 = vector.load %arg13[%c96_64, %c256_65] : memref<144x512xbf16, #tpu.memory_space<vmem>>, vector<16x256xbf16>
    tpu.vector_store %arg13[%c96_64, %c256_65], %85 {strides = array<i32>} : memref<144x512xbf16, #tpu.memory_space<vmem>>, vector<16x256xbf16>,
    %c0_66 = arith.constant 0 : index
    %c144 = arith.constant 144 : index
    %87 = vector.load %arg12[%c0_66, %c144] : memref<32x512xbf16, #tpu.memory_space<vmem>>, vector<16x256xbf16>
    %c112_67 = arith.constant 112 : index
    %c0_68 = arith.constant 0 : index
    %88 = vector.load %arg13[%c112_67, %c0_68] : memref<144x512xbf16, #tpu.memory_space<vmem>>, vector<16x256xbf16>
    tpu.vector_store %arg13[%c112_67, %c0_68], %87 {strides = array<i32>} : memref<144x512xbf16, #tpu.memory_space<vmem>>, vector<16x256xbf16>,
    %c16_69 = arith.constant 16 : index
    %c144_70 = arith.constant 144 : index
    %89 = vector.load %arg12[%c16_69, %c144_70] : memref<32x512xbf16, #tpu.memory_space<vmem>>, vector<16x256xbf16>
    %c112_71 = arith.constant 112 : index
    %c256_72 = arith.constant 256 : index
    %90 = vector.load %arg13[%c112_71, %c256_72] : memref<144x512xbf16, #tpu.memory_space<vmem>>, vector<16x256xbf16>
    tpu.vector_store %arg13[%c112_71, %c256_72], %89 {strides = array<i32>} : memref<144x512xbf16, #tpu.memory_space<vmem>>, vector<16x256xbf16>,
    %c0_73 = arith.constant 0 : index
    %c145 = arith.constant 145 : index
    %91 = vector.load %arg12[%c0_73, %c145] : memref<32x512xbf16, #tpu.memory_space<vmem>>, vector<16x256xbf16>
    %92 = arith.extf %91 : vector<16x256xbf16> to vector<16x256xf32>
    %93 = arith.mulf %92, %28 : vector<16x256xf32>
    %94 = arith.truncf %93 : vector<16x256xf32> to vector<16x256xbf16>
    %c128_74 = arith.constant 128 : index
    %c0_75 = arith.constant 0 : index
    %95 = vector.load %arg13[%c128_74, %c0_75] : memref<144x512xbf16, #tpu.memory_space<vmem>>, vector<16x256xbf16>
    tpu.vector_store %arg13[%c128_74, %c0_75], %94 {strides = array<i32>} : memref<144x512xbf16, #tpu.memory_space<vmem>>, vector<16x256xbf16>,
    %c16_76 = arith.constant 16 : index
    %c145_77 = arith.constant 145 : index
    %96 = vector.load %arg12[%c16_76, %c145_77] : memref<32x512xbf16, #tpu.memory_space<vmem>>, vector<16x256xbf16>
    %97 = arith.extf %96 : vector<16x256xbf16> to vector<16x256xf32>
    %98 = arith.mulf %97, %28 : vector<16x256xf32>
    %99 = arith.truncf %98 : vector<16x256xf32> to vector<16x256xbf16>
    %c128_78 = arith.constant 128 : index
    %c256_79 = arith.constant 256 : index
    %100 = vector.load %arg13[%c128_78, %c256_79] : memref<144x512xbf16, #tpu.memory_space<vmem>>, vector<16x256xbf16>
    tpu.vector_store %arg13[%c128_78, %c256_79], %99 {strides = array<i32>} : memref<144x512xbf16, #tpu.memory_space<vmem>>, vector<16x256xbf16>,
    %c0_80 = arith.constant 0 : index
    %c0_81 = arith.constant 0 : index
    %101 = vector.load %arg5[%c0_80, %c0_81] : memref<8x144xf32, #tpu.memory_space<vmem>>, vector<8x144xf32>
    %c0_82 = arith.constant 0 : index
    %c0_83 = arith.constant 0 : index
    %102 = vector.load %arg13[%c0_82, %c0_83] : memref<144x512xbf16, #tpu.memory_space<vmem>>, vector<144x512xbf16>
    %103 = arith.truncf %101 : vector<8x144xf32> to vector<8x144xbf16>
    %cst_84 = arith.constant dense<0.000000e+00> : vector<8x512xf32>
    %104 = tpu.matmul %103, %102, %cst_84 {dimension_numbers = #tpu.dot_dimension_numbers<[1], [0], [0], [1], [0, 0, 1, 1], [], []>} : vector<8x144xbf16>, vector<144x512xbf16>, vector<8x512xf32> -> vector<8x512xf32>
    %c0_85 = arith.constant 0 : index
    %c0_86 = arith.constant 0 : index
    %105 = vector.load %arg6[%c0_85, %c0_86] : memref<8x1xf32, #tpu.memory_space<vmem>>, vector<8x1xf32>
    %c0_87 = arith.constant 0 : index
    %c0_88 = arith.constant 0 : index
    %106 = vector.load %arg7[%c0_87, %c0_88] : memref<8x1xf32, #tpu.memory_space<vmem>>, vector<8x1xf32>
    %cst_89 = arith.constant dense<0.000000e+00> : vector<8xf32>
    %107 = vector.multi_reduction <add>, %104, %cst_89 [1] : vector<8x512xf32> to vector<8xf32>
    %108 = vector.shape_cast %107 : vector<8xf32> to vector<8x1xf32>
    %cst_90 = arith.constant 0.001953125 : f32
    %109 = vector.broadcast %cst_90 : f32 to vector<8x1xf32>
    %110 = arith.mulf %108, %109 : vector<8x1xf32>
    %111 = arith.mulf %104, %104 : vector<8x512xf32>
    %cst_91 = arith.constant dense<0.000000e+00> : vector<8xf32>
    %112 = vector.multi_reduction <add>, %111, %cst_91 [1] : vector<8x512xf32> to vector<8xf32>
    %113 = vector.shape_cast %112 : vector<8xf32> to vector<8x1xf32>
    %cst_92 = arith.constant 0.001953125 : f32
    %114 = vector.broadcast %cst_92 : f32 to vector<8x1xf32>
    %115 = arith.mulf %113, %114 : vector<8x1xf32>
    %116 = arith.mulf %110, %110 : vector<8x1xf32>
    %117 = arith.subf %115, %116 : vector<8x1xf32>
    %cst_93 = arith.constant 9.99999974E-6 : f32
    %118 = vector.broadcast %cst_93 : f32 to vector<8x1xf32>
    %119 = arith.addf %117, %118 : vector<8x1xf32>
    %120 = math.rsqrt %119 : vector<8x1xf32>
    %121 = arith.mulf %105, %120 : vector<8x1xf32>
    %122 = arith.mulf %110, %121 : vector<8x1xf32>
    %123 = arith.subf %106, %122 : vector<8x1xf32>
    %124 = vector.broadcast %121 : vector<8x1xf32> to vector<8x512xf32>
    %125 = arith.mulf %104, %124 : vector<8x512xf32>
    %126 = vector.broadcast %123 : vector<8x1xf32> to vector<8x512xf32>
    %127 = arith.addf %125, %126 : vector<8x512xf32>
    %cst_94 = arith.constant 0.000000e+00 : f32
    %128 = vector.broadcast %cst_94 : f32 to vector<8x512xf32>
    %129 = arith.maximumf %127, %128 : vector<8x512xf32>
    %130 = vector.extract_strided_slice %129 {offsets = [0, 0], sizes = [8, 256], strides = [1, 1]} : vector<8x512xf32> to vector<8x256xf32>
    %131 = arith.truncf %130 : vector<8x256xf32> to vector<8x256xbf16>
    %c0_95 = arith.constant 0 : index
    %c128_96 = arith.constant 128 : index
    %132 = vector.load %arg12[%c0_95, %c128_96] : memref<32x512xbf16, #tpu.memory_space<vmem>>, vector<8x256xbf16>
    tpu.vector_store %arg12[%c0_95, %c128_96], %131 {strides = array<i32>} : memref<32x512xbf16, #tpu.memory_space<vmem>>, vector<8x256xbf16>,
    %133 = vector.extract_strided_slice %129 {offsets = [0, 256], sizes = [8, 256], strides = [1, 1]} : vector<8x512xf32> to vector<8x256xf32>
    %134 = arith.truncf %133 : vector<8x256xf32> to vector<8x256xbf16>
    %c8_97 = arith.constant 8 : index
    %c128_98 = arith.constant 128 : index
    %135 = vector.load %arg12[%c8_97, %c128_98] : memref<32x512xbf16, #tpu.memory_space<vmem>>, vector<8x256xbf16>
    tpu.vector_store %arg12[%c8_97, %c128_98], %134 {strides = array<i32>} : memref<32x512xbf16, #tpu.memory_space<vmem>>, vector<8x256xbf16>,
    %136 = vector.shape_cast %0 : vector<1x256xf32> to vector<1x256xf32>
    %137 = vector.broadcast %136 : vector<1x256xf32> to vector<8x256xf32>
    %138 = vector.shape_cast %1 : vector<1x256xf32> to vector<1x256xf32>
    %139 = vector.broadcast %138 : vector<1x256xf32> to vector<8x256xf32>
    %c0_99 = arith.constant 0 : index
    %c111_100 = arith.constant 111 : index
    %140 = vector.load %arg12[%c0_99, %c111_100] : memref<32x512xbf16, #tpu.memory_space<vmem>>, vector<8x256xbf16>
    %141 = arith.extf %140 : vector<8x256xbf16> to vector<8x256xf32>
    %142 = arith.mulf %141, %137 : vector<8x256xf32>
    %143 = arith.truncf %142 : vector<8x256xf32> to vector<8x256xbf16>
    %c0_101 = arith.constant 0 : index
    %c0_102 = arith.constant 0 : index
    %144 = vector.load %arg13[%c0_101, %c0_102] : memref<144x512xbf16, #tpu.memory_space<vmem>>, vector<8x256xbf16>
    tpu.vector_store %arg13[%c0_101, %c0_102], %143 {strides = array<i32>} : memref<144x512xbf16, #tpu.memory_space<vmem>>, vector<8x256xbf16>,
    %c8_103 = arith.constant 8 : index
    %c111_104 = arith.constant 111 : index
    %145 = vector.load %arg12[%c8_103, %c111_104] : memref<32x512xbf16, #tpu.memory_space<vmem>>, vector<8x256xbf16>
    %146 = arith.extf %145 : vector<8x256xbf16> to vector<8x256xf32>
    %147 = arith.mulf %146, %137 : vector<8x256xf32>
    %148 = arith.truncf %147 : vector<8x256xf32> to vector<8x256xbf16>
    %c0_105 = arith.constant 0 : index
    %c256_106 = arith.constant 256 : index
    %149 = vector.load %arg13[%c0_105, %c256_106] : memref<144x512xbf16, #tpu.memory_space<vmem>>, vector<8x256xbf16>
    tpu.vector_store %arg13[%c0_105, %c256_106], %148 {strides = array<i32>} : memref<144x512xbf16, #tpu.memory_space<vmem>>, vector<8x256xbf16>,
    %c0_107 = arith.constant 0 : index
    %c112_108 = arith.constant 112 : index
    %150 = vector.load %arg12[%c0_107, %c112_108] : memref<32x512xbf16, #tpu.memory_space<vmem>>, vector<8x256xbf16>
    %c8_109 = arith.constant 8 : index
    %c0_110 = arith.constant 0 : index
    %151 = vector.load %arg13[%c8_109, %c0_110] : memref<144x512xbf16, #tpu.memory_space<vmem>>, vector<8x256xbf16>
    tpu.vector_store %arg13[%c8_109, %c0_110], %150 {strides = array<i32>} : memref<144x512xbf16, #tpu.memory_space<vmem>>, vector<8x256xbf16>,
    %c8_111 = arith.constant 8 : index
    %c112_112 = arith.constant 112 : index
    %152 = vector.load %arg12[%c8_111, %c112_112] : memref<32x512xbf16, #tpu.memory_space<vmem>>, vector<8x256xbf16>
    %c8_113 = arith.constant 8 : index
    %c256_114 = arith.constant 256 : index
    %153 = vector.load %arg13[%c8_113, %c256_114] : memref<144x512xbf16, #tpu.memory_space<vmem>>, vector<8x256xbf16>
    tpu.vector_store %arg13[%c8_113, %c256_114], %152 {strides = array<i32>} : memref<144x512xbf16, #tpu.memory_space<vmem>>, vector<8x256xbf16>,
    %c0_115 = arith.constant 0 : index
    %c113_116 = arith.constant 113 : index
    %154 = vector.load %arg12[%c0_115, %c113_116] : memref<32x512xbf16, #tpu.memory_space<vmem>>, vector<8x256xbf16>
    %155 = arith.extf %154 : vector<8x256xbf16> to vector<8x256xf32>
    %156 = arith.mulf %155, %139 : vector<8x256xf32>
    %157 = arith.truncf %156 : vector<8x256xf32> to vector<8x256xbf16>
    %c16_117 = arith.constant 16 : index
    %c0_118 = arith.constant 0 : index
    %158 = vector.load %arg13[%c16_117, %c0_118] : memref<144x512xbf16, #tpu.memory_space<vmem>>, vector<8x256xbf16>
    tpu.vector_store %arg13[%c16_117, %c0_118], %157 {strides = array<i32>} : memref<144x512xbf16, #tpu.memory_space<vmem>>, vector<8x256xbf16>,
    %c8_119 = arith.constant 8 : index
    %c113_120 = arith.constant 113 : index
    %159 = vector.load %arg12[%c8_119, %c113_120] : memref<32x512xbf16, #tpu.memory_space<vmem>>, vector<8x256xbf16>
    %160 = arith.extf %159 : vector<8x256xbf16> to vector<8x256xf32>
    %161 = arith.mulf %160, %139 : vector<8x256xf32>
    %162 = arith.truncf %161 : vector<8x256xf32> to vector<8x256xbf16>
    %c16_121 = arith.constant 16 : index
    %c256_122 = arith.constant 256 : index
    %163 = vector.load %arg13[%c16_121, %c256_122] : memref<144x512xbf16, #tpu.memory_space<vmem>>, vector<8x256xbf16>
    tpu.vector_store %arg13[%c16_121, %c256_122], %162 {strides = array<i32>} : memref<144x512xbf16, #tpu.memory_space<vmem>>, vector<8x256xbf16>,
    %c0_123 = arith.constant 0 : index
    %c127_124 = arith.constant 127 : index
    %164 = vector.load %arg12[%c0_123, %c127_124] : memref<32x512xbf16, #tpu.memory_space<vmem>>, vector<8x256xbf16>
    %165 = arith.extf %164 : vector<8x256xbf16> to vector<8x256xf32>
    %166 = arith.mulf %165, %137 : vector<8x256xf32>
    %167 = arith.truncf %166 : vector<8x256xf32> to vector<8x256xbf16>
    %c24_125 = arith.constant 24 : index
    %c0_126 = arith.constant 0 : index
    %168 = vector.load %arg13[%c24_125, %c0_126] : memref<144x512xbf16, #tpu.memory_space<vmem>>, vector<8x256xbf16>
    tpu.vector_store %arg13[%c24_125, %c0_126], %167 {strides = array<i32>} : memref<144x512xbf16, #tpu.memory_space<vmem>>, vector<8x256xbf16>,
    %c8_127 = arith.constant 8 : index
    %c127_128 = arith.constant 127 : index
    %169 = vector.load %arg12[%c8_127, %c127_128] : memref<32x512xbf16, #tpu.memory_space<vmem>>, vector<8x256xbf16>
    %170 = arith.extf %169 : vector<8x256xbf16> to vector<8x256xf32>
    %171 = arith.mulf %170, %137 : vector<8x256xf32>
    %172 = arith.truncf %171 : vector<8x256xf32> to vector<8x256xbf16>
    %c24_129 = arith.constant 24 : index
    %c256_130 = arith.constant 256 : index
    %173 = vector.load %arg13[%c24_129, %c256_130] : memref<144x512xbf16, #tpu.memory_space<vmem>>, vector<8x256xbf16>
    tpu.vector_store %arg13[%c24_129, %c256_130], %172 {strides = array<i32>} : memref<144x512xbf16, #tpu.memory_space<vmem>>, vector<8x256xbf16>,
    %c0_131 = arith.constant 0 : index
    %c128_132 = arith.constant 128 : index
    %174 = vector.load %arg12[%c0_131, %c128_132] : memref<32x512xbf16, #tpu.memory_space<vmem>>, vector<8x256xbf16>
    %c32_133 = arith.constant 32 : index
    %c0_134 = arith.constant 0 : index
    %175 = vector.load %arg13[%c32_133, %c0_134] : memref<144x512xbf16, #tpu.memory_space<vmem>>, vector<8x256xbf16>
    tpu.vector_store %arg13[%c32_133, %c0_134], %174 {strides = array<i32>} : memref<144x512xbf16, #tpu.memory_space<vmem>>, vector<8x256xbf16>,
    %c8_135 = arith.constant 8 : index
    %c128_136 = arith.constant 128 : index
    %176 = vector.load %arg12[%c8_135, %c128_136] : memref<32x512xbf16, #tpu.memory_space<vmem>>, vector<8x256xbf16>
    %c32_137 = arith.constant 32 : index
    %c256_138 = arith.constant 256 : index
    %177 = vector.load %arg13[%c32_137, %c256_138] : memref<144x512xbf16, #tpu.memory_space<vmem>>, vector<8x256xbf16>
    tpu.vector_store %arg13[%c32_137, %c256_138], %176 {strides = array<i32>} : memref<144x512xbf16, #tpu.memory_space<vmem>>, vector<8x256xbf16>,
    %c0_139 = arith.constant 0 : index
    %c129_140 = arith.constant 129 : index
    %178 = vector.load %arg12[%c0_139, %c129_140] : memref<32x512xbf16, #tpu.memory_space<vmem>>, vector<8x256xbf16>
    %179 = arith.extf %178 : vector<8x256xbf16> to vector<8x256xf32>
    %180 = arith.mulf %179, %139 : vector<8x256xf32>
    %181 = arith.truncf %180 : vector<8x256xf32> to vector<8x256xbf16>
    %c40 = arith.constant 40 : index
    %c0_141 = arith.constant 0 : index
    %182 = vector.load %arg13[%c40, %c0_141] : memref<144x512xbf16, #tpu.memory_space<vmem>>, vector<8x256xbf16>
    tpu.vector_store %arg13[%c40, %c0_141], %181 {strides = array<i32>} : memref<144x512xbf16, #tpu.memory_space<vmem>>, vector<8x256xbf16>,
    %c8_142 = arith.constant 8 : index
    %c129_143 = arith.constant 129 : index
    %183 = vector.load %arg12[%c8_142, %c129_143] : memref<32x512xbf16, #tpu.memory_space<vmem>>, vector<8x256xbf16>
    %184 = arith.extf %183 : vector<8x256xbf16> to vector<8x256xf32>
    %185 = arith.mulf %184, %139 : vector<8x256xf32>
    %186 = arith.truncf %185 : vector<8x256xf32> to vector<8x256xbf16>
    %c40_144 = arith.constant 40 : index
    %c256_145 = arith.constant 256 : index
    %187 = vector.load %arg13[%c40_144, %c256_145] : memref<144x512xbf16, #tpu.memory_space<vmem>>, vector<8x256xbf16>
    tpu.vector_store %arg13[%c40_144, %c256_145], %186 {strides = array<i32>} : memref<144x512xbf16, #tpu.memory_space<vmem>>, vector<8x256xbf16>,
    %c0_146 = arith.constant 0 : index
    %c143_147 = arith.constant 143 : index
    %188 = vector.load %arg12[%c0_146, %c143_147] : memref<32x512xbf16, #tpu.memory_space<vmem>>, vector<8x256xbf16>
    %189 = arith.extf %188 : vector<8x256xbf16> to vector<8x256xf32>
    %190 = arith.mulf %189, %137 : vector<8x256xf32>
    %191 = arith.truncf %190 : vector<8x256xf32> to vector<8x256xbf16>
    %c48_148 = arith.constant 48 : index
    %c0_149 = arith.constant 0 : index
    %192 = vector.load %arg13[%c48_148, %c0_149] : memref<144x512xbf16, #tpu.memory_space<vmem>>, vector<8x256xbf16>
    tpu.vector_store %arg13[%c48_148, %c0_149], %191 {strides = array<i32>} : memref<144x512xbf16, #tpu.memory_space<vmem>>, vector<8x256xbf16>,
    %c8_150 = arith.constant 8 : index
    %c143_151 = arith.constant 143 : index
    %193 = vector.load %arg12[%c8_150, %c143_151] : memref<32x512xbf16, #tpu.memory_space<vmem>>, vector<8x256xbf16>
    %194 = arith.extf %193 : vector<8x256xbf16> to vector<8x256xf32>
    %195 = arith.mulf %194, %137 : vector<8x256xf32>
    %196 = arith.truncf %195 : vector<8x256xf32> to vector<8x256xbf16>
    %c48_152 = arith.constant 48 : index
    %c256_153 = arith.constant 256 : index
    %197 = vector.load %arg13[%c48_152, %c256_153] : memref<144x512xbf16, #tpu.memory_space<vmem>>, vector<8x256xbf16>
    tpu.vector_store %arg13[%c48_152, %c256_153], %196 {strides = array<i32>} : memref<144x512xbf16, #tpu.memory_space<vmem>>, vector<8x256xbf16>,
    %c0_154 = arith.constant 0 : index
    %c144_155 = arith.constant 144 : index
    %198 = vector.load %arg12[%c0_154, %c144_155] : memref<32x512xbf16, #tpu.memory_space<vmem>>, vector<8x256xbf16>
    %c56 = arith.constant 56 : index
    %c0_156 = arith.constant 0 : index
    %199 = vector.load %arg13[%c56, %c0_156] : memref<144x512xbf16, #tpu.memory_space<vmem>>, vector<8x256xbf16>
    tpu.vector_store %arg13[%c56, %c0_156], %198 {strides = array<i32>} : memref<144x512xbf16, #tpu.memory_space<vmem>>, vector<8x256xbf16>,
    %c8_157 = arith.constant 8 : index
    %c144_158 = arith.constant 144 : index
    %200 = vector.load %arg12[%c8_157, %c144_158] : memref<32x512xbf16, #tpu.memory_space<vmem>>, vector<8x256xbf16>
    %c56_159 = arith.constant 56 : index
    %c256_160 = arith.constant 256 : index
    %201 = vector.load %arg13[%c56_159, %c256_160] : memref<144x512xbf16, #tpu.memory_space<vmem>>, vector<8x256xbf16>
    tpu.vector_store %arg13[%c56_159, %c256_160], %200 {strides = array<i32>} : memref<144x512xbf16, #tpu.memory_space<vmem>>, vector<8x256xbf16>,
    %c0_161 = arith.constant 0 : index
    %c145_162 = arith.constant 145 : index
    %202 = vector.load %arg12[%c0_161, %c145_162] : memref<32x512xbf16, #tpu.memory_space<vmem>>, vector<8x256xbf16>
    %203 = arith.extf %202 : vector<8x256xbf16> to vector<8x256xf32>
    %204 = arith.mulf %203, %139 : vector<8x256xf32>
    %205 = arith.truncf %204 : vector<8x256xf32> to vector<8x256xbf16>
    %c64_163 = arith.constant 64 : index
    %c0_164 = arith.constant 0 : index
    %206 = vector.load %arg13[%c64_163, %c0_164] : memref<144x512xbf16, #tpu.memory_space<vmem>>, vector<8x256xbf16>
    tpu.vector_store %arg13[%c64_163, %c0_164], %205 {strides = array<i32>} : memref<144x512xbf16, #tpu.memory_space<vmem>>, vector<8x256xbf16>,
    %c8_165 = arith.constant 8 : index
    %c145_166 = arith.constant 145 : index
    %207 = vector.load %arg12[%c8_165, %c145_166] : memref<32x512xbf16, #tpu.memory_space<vmem>>, vector<8x256xbf16>
    %208 = arith.extf %207 : vector<8x256xbf16> to vector<8x256xf32>
    %209 = arith.mulf %208, %139 : vector<8x256xf32>
    %210 = arith.truncf %209 : vector<8x256xf32> to vector<8x256xbf16>
    %c64_167 = arith.constant 64 : index
    %c256_168 = arith.constant 256 : index
    %211 = vector.load %arg13[%c64_167, %c256_168] : memref<144x512xbf16, #tpu.memory_space<vmem>>, vector<8x256xbf16>
    tpu.vector_store %arg13[%c64_167, %c256_168], %210 {strides = array<i32>} : memref<144x512xbf16, #tpu.memory_space<vmem>>, vector<8x256xbf16>,
    %c0_169 = arith.constant 0 : index
    %c0_170 = arith.constant 0 : index
    %212 = vector.load %arg8[%c0_169, %c0_170] : memref<16x72xf32, #tpu.memory_space<vmem>>, vector<16x72xf32>
    %c0_171 = arith.constant 0 : index
    %c0_172 = arith.constant 0 : index
    %213 = vector.load %arg13[%c0_171, %c0_172] : memref<144x512xbf16, #tpu.memory_space<vmem>>, vector<72x512xbf16>
    %214 = arith.truncf %212 : vector<16x72xf32> to vector<16x72xbf16>
    %cst_173 = arith.constant dense<0.000000e+00> : vector<16x512xf32>
    %215 = tpu.matmul %214, %213, %cst_173 {dimension_numbers = #tpu.dot_dimension_numbers<[1], [0], [0], [1], [0, 0, 1, 1], [], []>} : vector<16x72xbf16>, vector<72x512xbf16>, vector<16x512xf32> -> vector<16x512xf32>
    %c0_174 = arith.constant 0 : index
    %c0_175 = arith.constant 0 : index
    %216 = vector.load %arg9[%c0_174, %c0_175] : memref<16x1xf32, #tpu.memory_space<vmem>>, vector<16x1xf32>
    %c0_176 = arith.constant 0 : index
    %c0_177 = arith.constant 0 : index
    %217 = vector.load %arg10[%c0_176, %c0_177] : memref<16x1xf32, #tpu.memory_space<vmem>>, vector<16x1xf32>
    %cst_178 = arith.constant dense<0.000000e+00> : vector<16xf32>
    %218 = vector.multi_reduction <add>, %215, %cst_178 [1] : vector<16x512xf32> to vector<16xf32>
    %219 = vector.shape_cast %218 : vector<16xf32> to vector<16x1xf32>
    %cst_179 = arith.constant 0.001953125 : f32
    %220 = vector.broadcast %cst_179 : f32 to vector<16x1xf32>
    %221 = arith.mulf %219, %220 : vector<16x1xf32>
    %222 = arith.mulf %215, %215 : vector<16x512xf32>
    %cst_180 = arith.constant dense<0.000000e+00> : vector<16xf32>
    %223 = vector.multi_reduction <add>, %222, %cst_180 [1] : vector<16x512xf32> to vector<16xf32>
    %224 = vector.shape_cast %223 : vector<16xf32> to vector<16x1xf32>
    %cst_181 = arith.constant 0.001953125 : f32
    %225 = vector.broadcast %cst_181 : f32 to vector<16x1xf32>
    %226 = arith.mulf %224, %225 : vector<16x1xf32>
    %227 = arith.mulf %221, %221 : vector<16x1xf32>
    %228 = arith.subf %226, %227 : vector<16x1xf32>
    %cst_182 = arith.constant 9.99999974E-6 : f32
    %229 = vector.broadcast %cst_182 : f32 to vector<16x1xf32>
    %230 = arith.addf %228, %229 : vector<16x1xf32>
    %231 = math.rsqrt %230 : vector<16x1xf32>
    %232 = arith.mulf %216, %231 : vector<16x1xf32>
    %233 = arith.mulf %221, %232 : vector<16x1xf32>
    %234 = arith.subf %217, %233 : vector<16x1xf32>
    %235 = vector.broadcast %232 : vector<16x1xf32> to vector<16x512xf32>
    %236 = arith.mulf %215, %235 : vector<16x512xf32>
    %237 = vector.broadcast %234 : vector<16x1xf32> to vector<16x512xf32>
    %238 = arith.addf %236, %237 : vector<16x512xf32>
    %cst_183 = arith.constant 0.000000e+00 : f32
    %239 = vector.broadcast %cst_183 : f32 to vector<16x512xf32>
    %240 = arith.maximumf %238, %239 : vector<16x512xf32>
    %241 = vector.extract_strided_slice %240 {offsets = [0, 0], sizes = [16, 256], strides = [1, 1]} : vector<16x512xf32> to vector<16x256xf32>
    %c0_184 = arith.constant 0 : index
    %c0_185 = arith.constant 0 : index
    %c0_186 = arith.constant 0 : index
    %242 = vector.load %arg11[%c0_184, %c0_185, %c0_186] : memref<2x16x256xf32, #tpu.memory_space<vmem>>, vector<1x16x256xf32>
    %243 = vector.shape_cast %242 : vector<1x16x256xf32> to vector<16x256xf32>
    %244 = vector.shape_cast %241 : vector<16x256xf32> to vector<1x16x256xf32>
    tpu.vector_store %arg11[%c0_184, %c0_185, %c0_186], %244 {strides = array<i32>} : memref<2x16x256xf32, #tpu.memory_space<vmem>>, vector<1x16x256xf32>,
    %245 = vector.extract_strided_slice %240 {offsets = [0, 256], sizes = [16, 256], strides = [1, 1]} : vector<16x512xf32> to vector<16x256xf32>
    %c1_187 = arith.constant 1 : index
    %c0_188 = arith.constant 0 : index
    %c0_189 = arith.constant 0 : index
    %246 = vector.load %arg11[%c1_187, %c0_188, %c0_189] : memref<2x16x256xf32, #tpu.memory_space<vmem>>, vector<1x16x256xf32>
    %247 = vector.shape_cast %246 : vector<1x16x256xf32> to vector<16x256xf32>
    %248 = vector.shape_cast %245 : vector<16x256xf32> to vector<1x16x256xf32>
    tpu.vector_store %arg11[%c1_187, %c0_188, %c0_189], %248 {strides = array<i32>} : memref<2x16x256xf32, #tpu.memory_space<vmem>>, vector<1x16x256xf32>,
    return
  }
}

</mosaic_0001>

<llo_original>
// kernel: up_forward.1
$region0: #{up_forward.1}
  #allocation0 [shape = 'u32[]', space=smem, size = 0x4, offset = 0x4, fixed_abs, tag = 'smem constant byte address 0x4 - core index']
  #allocation1 [shape = 'u32[144,128]{1,0:T(1,128)}', space=vmem, size = 0x12000, scoped, tag = 'internal scratch']
  #allocation2 [shape = 'bf16[32,512]{1,0:T(8,128)(2,1)}', space=vmem, size = 0x8000, scoped, tag = 'scratch operand']
  #allocation3 [shape = 'bf16[144,512]{1,0:T(8,128)(2,1)}', space=vmem, size = 0x24000, scoped, tag = 'scratch operand']
  %s0 = inlined_call_operand.vmem [shape: f32[2,8,64], index: 0, kind: input, shape index: {}]
  %s1 = inlined_call_operand.vmem [shape: f32[2,8,256], index: 1, kind: input, shape index: {}]
  %s2 = inlined_call_operand.vmem [shape: bf16[64,256], index: 2, kind: input, shape index: {}]
  %s3 = inlined_call_operand.vmem [shape: f32[1,256], index: 3, kind: input, shape index: {}]
  %s4 = inlined_call_operand.vmem [shape: f32[1,256], index: 4, kind: input, shape index: {}]
  %s5 = inlined_call_operand.vmem [shape: f32[8,144], index: 5, kind: input, shape index: {}]
  %s6 = inlined_call_operand.vmem [shape: f32[8,1], index: 6, kind: input, shape index: {}]
  %s7 = inlined_call_operand.vmem [shape: f32[8,1], index: 7, kind: input, shape index: {}]
  %s8 = inlined_call_operand.vmem [shape: f32[16,72], index: 8, kind: input, shape index: {}]
  %s9 = inlined_call_operand.vmem [shape: f32[16,1], index: 9, kind: input, shape index: {}]
  %s10 = inlined_call_operand.vmem [shape: f32[16,1], index: 10, kind: input, shape index: {}]
  %s11 = inlined_call_operand.vmem [shape: f32[2,16,256], index: 11, kind: output, shape index: {}]
  %s12 = sld [smem:[#allocation0]]
  $region54: #{up_forward.1} parent=0
    _
  %s14 = ssub.s32 1, %s12
  %s15 = scalar_select 0, %s14, %s12
  // Predicated region
  $region2: #{up_forward.1} parent=0 // pred_check
    _
  $region3: #{up_forward.1} parent=0 // pred_check_branch
    %17 = sbr.rel (0) target = $region5
  $region4: #{up_forward.1} parent=0 // pred_region
    _
  $region5: #{up_forward.1} parent=0 // pred_fallthru
    _
  // Predicated region
  $region6: #{up_forward.1} parent=0 // pred_check
    _
  $region7: #{up_forward.1} parent=0 // pred_check_branch
    %19 = sbr.rel (0) target = $region9
  $region8: #{up_forward.1} parent=0 // pred_region
    _
  $region9: #{up_forward.1} parent=0 // pred_fallthru
    _
  // Predicated region
  $region10: #{up_forward.1} parent=0 // pred_check
    _
  $region11: #{up_forward.1} parent=0 // pred_check_branch
    %21 = sbr.rel (0) target = $region13
  $region12: #{up_forward.1} parent=0 // pred_region
    _
  $region13: #{up_forward.1} parent=0 // pred_fallthru
    _
  // Predicated region
  $region14: #{up_forward.1} parent=0 // pred_check
    _
  $region15: #{up_forward.1} parent=0 // pred_check_branch
    %23 = sbr.rel (0) target = $region17
  $region16: #{up_forward.1} parent=0 // pred_region
    _
  $region17: #{up_forward.1} parent=0 // pred_fallthru
    _
  // Predicated region
  $region18: #{up_forward.1} parent=0 // pred_check
    _
  $region19: #{up_forward.1} parent=0 // pred_check_branch
    %25 = sbr.rel (0) target = $region21
  $region20: #{up_forward.1} parent=0 // pred_region
    _
  $region21: #{up_forward.1} parent=0 // pred_fallthru
    _
  // Predicated region
  $region22: #{up_forward.1} parent=0 // pred_check
    _
  $region23: #{up_forward.1} parent=0 // pred_check_branch
    %27 = sbr.rel (0) target = $region25
  $region24: #{up_forward.1} parent=0 // pred_region
    _
  $region25: #{up_forward.1} parent=0 // pred_fallthru
    _
  // Predicated region
  $region26: #{up_forward.1} parent=0 // pred_check
    _
  $region27: #{up_forward.1} parent=0 // pred_check_branch
    %29 = sbr.rel (0) target = $region29
  $region28: #{up_forward.1} parent=0 // pred_region
    _
  $region29: #{up_forward.1} parent=0 // pred_fallthru
    _
  // Predicated region
  $region30: #{up_forward.1} parent=0 // pred_check
    _
  $region31: #{up_forward.1} parent=0 // pred_check_branch
    %31 = sbr.rel (0) target = $region33
  $region32: #{up_forward.1} parent=0 // pred_region
    _
  $region33: #{up_forward.1} parent=0 // pred_fallthru
    _
  // Predicated region
  $region34: #{up_forward.1} parent=0 // pred_check
    _
  $region35: #{up_forward.1} parent=0 // pred_check_branch
    %33 = sbr.rel (0) target = $region37
  $region36: #{up_forward.1} parent=0 // pred_region
    _
  $region37: #{up_forward.1} parent=0 // pred_fallthru
    _
  // Predicated region
  $region38: #{up_forward.1} parent=0 // pred_check
    _
  $region39: #{up_forward.1} parent=0 // pred_check_branch
    %35 = sbr.rel (0) target = $region41
  $region40: #{up_forward.1} parent=0 // pred_region
    _
  $region41: #{up_forward.1} parent=0 // pred_fallthru
    _
  // Predicated region
  $region42: #{up_forward.1} parent=0 // pred_check
    _
  $region43: #{up_forward.1} parent=0 // pred_check_branch
    %37 = sbr.rel (0) target = $region45
  $region44: #{up_forward.1} parent=0 // pred_region
    _
  $region45: #{up_forward.1} parent=0 // pred_fallthru
    _
  %v39 = vld [vmem:[%s3] sm:$0x3]
  %v40 = vld [vmem:[%s4] sm:$0x3]
  %v41 = vld [vmem:[%s0] sm:$0xff]
  %v42 = vld [vmem:[%s0 + $0x8] sm:$0xff]
  %v43 = vpack.c.bf16 %v42, %v41
  %v44 = vld [vmem:[%s2] sm:$0xff]
  %v45 = vld [vmem:[%s2 + $0x8] sm:$0xff]
  %v46 = vld [vmem:[%s2 + $0x10] sm:$0xff]
  %v47 = vld [vmem:[%s2 + $0x18] sm:$0xff]
  %v48 = vld [vmem:[%s2 + $0x20] sm:$0xff]
  %v49 = vld [vmem:[%s2 + $0x28] sm:$0xff]
  %v50 = vld [vmem:[%s2 + $0x30] sm:$0xff]
  %v51 = vld [vmem:[%s2 + $0x38] sm:$0xff]
  %v60 = vunpack.c.l.b16 %v44
  %v61 = vunpack.c.h.b16 %v44
  %v62 = vunpack.c.l.b16 %v45
  %v63 = vunpack.c.h.b16 %v45
  %v64 = vunpack.c.l.b16 %v46
  %v65 = vunpack.c.h.b16 %v46
  %v66 = vunpack.c.l.b16 %v47
  %v67 = vunpack.c.h.b16 %v47
  %v68 = vunpack.c.l.b16 %v48
  %v69 = vunpack.c.h.b16 %v48
  %v70 = vunpack.c.l.b16 %v49
  %v71 = vunpack.c.h.b16 %v49
  %v72 = vunpack.c.l.b16 %v50
  %v73 = vunpack.c.h.b16 %v50
  %v74 = vunpack.c.l.b16 %v51
  %v75 = vunpack.c.h.b16 %v51
  %v76 = vpack.c.b16 %v62, %v60
  %v77 = vpack.c.b16 %v63, %v61
  %v78 = vpack.c.b16 %v66, %v64
  %v79 = vpack.c.b16 %v67, %v65
  %v80 = vpack.c.b16 %v70, %v68
  %v81 = vpack.c.b16 %v71, %v69
  %v82 = vpack.c.b16 %v74, %v72
  %v83 = vpack.c.b16 %v75, %v73
  %vm92 = vcmask 523264
  %v94 = vsel %vm92, %v43, 0
  %96 = vmatprep.subr.bf16.mxu0 0
  %97 = vmatpush1.bf16.msra.mxu0 0
  %98 = vmatprep.subr.bf16.mxu0 0
  %99 = vmatpush1.bf16.msra.mxu0 0
  %100 = vmatprep.subr.bf16.mxu0 0
  %101 = vmatpush1.bf16.msra.mxu0 0
  %102 = vmatprep.subr.bf16.mxu0 0
  %103 = vmatpush1.bf16.msra.mxu0 0
  %104 = vmatprep.subr.bf16.mxu0 %v83
  %105 = vmatpush1.bf16.msra.mxu0 %v82
  %106 = vmatprep.subr.bf16.mxu0 %v81
  %107 = vmatpush1.bf16.msra.mxu0 %v80
  %108 = vmatprep.subr.bf16.mxu0 %v79
  %109 = vmatpush1.bf16.msra.mxu0 %v78
  %110 = vmatprep.subr.bf16.mxu0 %v77
  %111 = vmatpush1.bf16.msra.mxu0 %v76
  %112 = vmatprep.subr.bf16.mxu0 0
  %113 = vmatpush2.bf16.msra.mxu0 0
  %114 = vmatprep.subr.bf16.mxu0 0
  %115 = vmatpush2.bf16.msra.mxu0 0
  %116 = vmatprep.subr.bf16.mxu0 0
  %117 = vmatpush2.bf16.msra.mxu0 0
  %118 = vmatprep.subr.bf16.mxu0 0
  %119 = vmatpush2.bf16.msra.mxu0 0
  %120 = vmatprep.subr.bf16.mxu0 0
  %121 = vmatpush2.bf16.msra.mxu0 0
  %122 = vmatprep.subr.bf16.mxu0 0
  %123 = vmatpush2.bf16.msra.mxu0 0
  %124 = vmatprep.subr.bf16.mxu0 0
  %125 = vmatpush2.bf16.msra.mxu0 0
  %126 = vmatprep.subr.bf16.mxu0 0
  %127 = vmatpush2.bf16.msra.mxu0 0
  %128 = vmatprep.mubr.bf16.mxu0 0
  %129 = vmatmul.mubr.bf16.gmra.mxu0 %v94
  %v130 = vpop.f32.mrf.mxu0
  %v131 = vadd.f32 0.0, %v130
  %v132 = vpop.f32.mrf.mxu0
  %v133 = vadd.f32 0.0, %v132
  %v134 = vpop.f32.mrf.mxu0
  %v135 = vadd.f32 0.0, %v134
  %v136 = vpop.f32.mrf.mxu0
  %v137 = vadd.f32 0.0, %v136
  %138 = vdwg.mxu0
  %139 = vst [vmem:[#allocation2] sm:$0xf] 0
  %140 = vst [vmem:[#allocation2 + $0x10] sm:$0xf] 0
  %141 = vst [vmem:[#allocation2 + $0x20] sm:$0xf] 0
  %142 = vst [vmem:[#allocation2 + $0x30] sm:$0xf] 0
  %143 = vst [vmem:[#allocation2 + $0xc] sm:$0xf] 0
  %144 = vst [vmem:[#allocation2 + $0x1c] sm:$0xf] 0
  %145 = vst [vmem:[#allocation2 + $0x2c] sm:$0xf] 0
  %146 = vst [vmem:[#allocation2 + $0x3c] sm:$0xf] 0
  %v147 = vld [vmem:[%s1] sm:$0xff]
  %v148 = vld [vmem:[%s1 + $0x8] sm:$0xff]
  %v149 = vpack.c.bf16 %v147, %v147
  %v150 = vpack.c.bf16 %v148, %v148
  %v153 = vunpack.c.l.b16 %v149
  %v154 = vunpack.c.l.b16 %v150
  %v155 = vpack.c.b16 %v154, %v153
  %157 = vst [vmem:[#allocation2 + $0x4] sm:$0xff] %v155
  %v158 = vpack.c.bf16 %v131, %v131
  %v159 = vpack.c.bf16 %v133, %v133
  %v162 = vunpack.c.l.b16 %v158
  %v163 = vunpack.c.l.b16 %v159
  %v164 = vpack.c.b16 %v163, %v162
  %166 = vst [vmem:[#allocation2 + $0x14] sm:$0xff] %v164
  %s167 = scalar_lea.vmem %s1, 16
  %v168 = vld [vmem:[%s167] sm:$0xff]
  %v169 = vld [vmem:[%s167 + $0x8] sm:$0xff]
  %v170 = vpack.c.bf16 %v168, %v168
  %v171 = vpack.c.bf16 %v169, %v169
  %v174 = vunpack.c.l.b16 %v170
  %v175 = vunpack.c.l.b16 %v171
  %v176 = vpack.c.b16 %v175, %v174
  %178 = vst [vmem:[#allocation2 + $0x24] sm:$0xff] %v176
  %v179 = vpack.c.bf16 %v135, %v135
  %v180 = vpack.c.bf16 %v137, %v137
  %v183 = vunpack.c.l.b16 %v179
  %v184 = vunpack.c.l.b16 %v180
  %v185 = vpack.c.b16 %v184, %v183
  %187 = vst [vmem:[#allocation2 + $0x34] sm:$0xff] %v185
  %v189 = vlaneseq
  %v190 = vshrl.u32 %v189, 7
  %v191 = vsub.s32 0, %v190
  %v192 = vrot.slane %v39, %v191
  %v193 = vlaneseq
  %v194 = vshrl.u32 %v193, 7
  %v195 = vsub.s32 1, %v194
  %v196 = vrot.slane %v39, %v195
  %v198 = vlaneseq
  %v199 = vshrl.u32 %v198, 7
  %v200 = vsub.s32 0, %v199
  %v201 = vrot.slane %v40, %v200
  %v202 = vlaneseq
  %v203 = vshrl.u32 %v202, 7
  %v204 = vsub.s32 1, %v203
  %v205 = vrot.slane %v40, %v204
  %v206 = vld [vmem:[#allocation2] sm:$0xff]
  %v207 = vld [vmem:[#allocation2 + $0x8] sm:$0xf]
  %v208 = vld [vmem:[#allocation2 + $0x10] sm:$0xff]
  %v209 = vld [vmem:[#allocation2 + $0x18] sm:$0xf]
  %v210 = vunpack.c.l.bf16 %v206
  %v211 = vunpack.c.h.bf16 %v206
  %v212 = vunpack.c.l.bf16 %v207
  %v213 = vunpack.c.l.bf16 %v208
  %v214 = vunpack.c.h.bf16 %v208
  %v215 = vunpack.c.l.bf16 %v209
  %216 = vrot.lane.b32.xlu0 %v192, 111
  %v217 = vpop.permute.xlu0 %216
  %218 = vrot.lane.b32.xlu0 %v196, 111
  %v219 = vpop.permute.xlu0 %218
  %vm220 = vcmask 908288
  %v221 = vsel %vm220, %v217, %v219
  %v225 = vmul.f32 %v210, %v217
  %v226 = vmul.f32 %v211, %v221
  %v227 = vmul.f32 %v212, %v219
  %v228 = vmul.f32 %v213, %v217
  %v229 = vmul.f32 %v214, %v221
  %v230 = vmul.f32 %v215, %v219
  %v231 = vpack.c.bf16 %v228, %v225
  %v232 = vpack.c.bf16 %v229, %v226
  %v233 = vpack.c.bf16 %v230, %v227
  %v237 = vunpack.c.l.b16 %v231
  %v238 = vunpack.c.l.b16 %v232
  %v239 = vunpack.c.l.b16 %v233
  %v240 = vunpack.c.h.b16 %v231
  %v241 = vunpack.c.h.b16 %v232
  %v242 = vunpack.c.h.b16 %v233
  %v243 = vpack.c.b16 %v238, %v237
  %v244 = vpack.c.b16 %v239, %v239
  %v245 = vpack.c.b16 %v241, %v240
  %v246 = vpack.c.b16 %v242, %v242
  %247 = vrot.lane.b32.xlu0 %v243, 17
  %v248 = vpop.permute.xlu0 %247
  %249 = vrot.lane.b32.xlu0 %v244, 17
  %v250 = vpop.permute.xlu0 %249
  %251 = vrot.lane.b32.xlu0 %v245, 17
  %v252 = vpop.permute.xlu0 %251
  %253 = vrot.lane.b32.xlu0 %v246, 17
  %v254 = vpop.permute.xlu0 %253
  %v255 = vrot.slane %v248, 4
  %v256 = vrot.slane %v250, 4
  %v257 = vrot.slane %v252, 4
  %v258 = vrot.slane %v254, 4
  %vm259 = vcmask 1043456
  %v260 = vsel %vm259, %v255, %v256
  %vm261 = vcmask 138240
  %v262 = vsel %vm261, %v248, %v260
  %v263 = vsel %vm259, %v257, %v258
  %v264 = vsel %vm261, %v252, %v263
  %267 = vst [vmem:[#allocation3] sm:$0xff] %v262
  %268 = vst [vmem:[#allocation3 + $0x10] sm:$0xff] %v264
  %v269 = vld [vmem:[#allocation2 + $0x20] sm:$0xff]
  %v270 = vld [vmem:[#allocation2 + $0x28] sm:$0xf]
  %v271 = vld [vmem:[#allocation2 + $0x30] sm:$0xff]
  %v272 = vld [vmem:[#allocation2 + $0x38] sm:$0xf]
  %v273 = vunpack.c.l.bf16 %v269
  %v274 = vunpack.c.h.bf16 %v269
  %v275 = vunpack.c.l.bf16 %v270
  %v276 = vunpack.c.l.bf16 %v271
  %v277 = vunpack.c.h.bf16 %v271
  %v278 = vunpack.c.l.bf16 %v272
  %v279 = vmul.f32 %v273, %v217
  %v280 = vmul.f32 %v274, %v221
  %v281 = vmul.f32 %v275, %v219
  %v282 = vmul.f32 %v276, %v217
  %v283 = vmul.f32 %v277, %v221
  %v284 = vmul.f32 %v278, %v219
  %v285 = vpack.c.bf16 %v282, %v279
  %v286 = vpack.c.bf16 %v283, %v280
  %v287 = vpack.c.bf16 %v284, %v281
  %v291 = vunpack.c.l.b16 %v285
  %v292 = vunpack.c.l.b16 %v286
  %v293 = vunpack.c.l.b16 %v287
  %v294 = vunpack.c.h.b16 %v285
  %v295 = vunpack.c.h.b16 %v286
  %v296 = vunpack.c.h.b16 %v287
  %v297 = vpack.c.b16 %v292, %v291
  %v298 = vpack.c.b16 %v293, %v293
  %v299 = vpack.c.b16 %v295, %v294
  %v300 = vpack.c.b16 %v296, %v296
  %301 = vrot.lane.b32.xlu0 %v297, 17
  %v302 = vpop.permute.xlu0 %301
  %303 = vrot.lane.b32.xlu0 %v298, 17
  %v304 = vpop.permute.xlu0 %303
  %305 = vrot.lane.b32.xlu0 %v299, 17
  %v306 = vpop.permute.xlu0 %305
  %307 = vrot.lane.b32.xlu0 %v300, 17
  %v308 = vpop.permute.xlu0 %307
  %v309 = vrot.slane %v302, 4
  %v310 = vrot.slane %v304, 4
  %v311 = vrot.slane %v306, 4
  %v312 = vrot.slane %v308, 4
  %v313 = vsel %vm259, %v309, %v310
  %v314 = vsel %vm261, %v302, %v313
  %v315 = vsel %vm259, %v311, %v312
  %v316 = vsel %vm261, %v306, %v315
  %319 = vst [vmem:[#allocation3 + $0x8] sm:$0xff] %v314
  %320 = vst [vmem:[#allocation3 + $0x18] sm:$0xff] %v316
  %v321 = vld [vmem:[#allocation2] sm:$0xff]
  %v322 = vld [vmem:[#allocation2 + $0x8] sm:$0xf]
  %v323 = vld [vmem:[#allocation2 + $0x10] sm:$0xff]
  %v324 = vld [vmem:[#allocation2 + $0x18] sm:$0xf]
  %329 = vrot.lane.b32.xlu0 %v321, 16
  %v330 = vpop.permute.xlu0 %329
  %331 = vrot.lane.b32.xlu0 %v322, 16
  %v332 = vpop.permute.xlu0 %331
  %333 = vrot.lane.b32.xlu0 %v323, 16
  %v334 = vpop.permute.xlu0 %333
  %335 = vrot.lane.b32.xlu0 %v324, 16
  %v336 = vpop.permute.xlu0 %335
  %v337 = vrot.slane %v330, 4
  %v338 = vrot.slane %v332, 4
  %v339 = vrot.slane %v334, 4
  %v340 = vrot.slane %v336, 4
  %v341 = vsel %vm259, %v337, %v338
  %vm342 = vcmask 130048
  %v343 = vsel %vm342, %v330, %v341
  %v344 = vsel %vm259, %v339, %v340
  %v345 = vsel %vm342, %v334, %v344
  %348 = vst [vmem:[#allocation3 + $0x20] sm:$0xff] %v343
  %349 = vst [vmem:[#allocation3 + $0x30] sm:$0xff] %v345
  %v350 = vld [vmem:[#allocation2 + $0x20] sm:$0xff]
  %v351 = vld [vmem:[#allocation2 + $0x28] sm:$0xf]
  %v352 = vld [vmem:[#allocation2 + $0x30] sm:$0xff]
  %v353 = vld [vmem:[#allocation2 + $0x38] sm:$0xf]
  %358 = vrot.lane.b32.xlu0 %v350, 16
  %v359 = vpop.permute.xlu0 %358
  %360 = vrot.lane.b32.xlu0 %v351, 16
  %v361 = vpop.permute.xlu0 %360
  %362 = vrot.lane.b32.xlu0 %v352, 16
  %v363 = vpop.permute.xlu0 %362
  %364 = vrot.lane.b32.xlu0 %v353, 16
  %v365 = vpop.permute.xlu0 %364
  %v366 = vrot.slane %v359, 4
  %v367 = vrot.slane %v361, 4
  %v368 = vrot.slane %v363, 4
  %v369 = vrot.slane %v365, 4
  %v370 = vsel %vm259, %v366, %v367
  %v371 = vsel %vm342, %v359, %v370
  %v372 = vsel %vm259, %v368, %v369
  %v373 = vsel %vm342, %v363, %v372
  %376 = vst [vmem:[#allocation3 + $0x28] sm:$0xff] %v371
  %377 = vst [vmem:[#allocation3 + $0x38] sm:$0xff] %v373
  %v378 = vld [vmem:[#allocation2] sm:$0xff]
  %v379 = vld [vmem:[#allocation2 + $0x8] sm:$0xf]
  %v380 = vld [vmem:[#allocation2 + $0x10] sm:$0xff]
  %v381 = vld [vmem:[#allocation2 + $0x18] sm:$0xf]
  %v382 = vunpack.c.l.bf16 %v378
  %v383 = vunpack.c.h.bf16 %v378
  %v384 = vunpack.c.l.bf16 %v379
  %v385 = vunpack.c.l.bf16 %v380
  %v386 = vunpack.c.h.bf16 %v380
  %v387 = vunpack.c.l.bf16 %v381
  %388 = vrot.lane.b32.xlu0 %v201, 113
  %v389 = vpop.permute.xlu0 %388
  %390 = vrot.lane.b32.xlu0 %v205, 113
  %v391 = vpop.permute.xlu0 %390
  %vm392 = vcmask 924672
  %v393 = vsel %vm392, %v389, %v391
  %v397 = vmul.f32 %v382, %v389
  %v398 = vmul.f32 %v383, %v393
  %v399 = vmul.f32 %v384, %v391
  %v400 = vmul.f32 %v385, %v389
  %v401 = vmul.f32 %v386, %v393
  %v402 = vmul.f32 %v387, %v391
  %v403 = vpack.c.bf16 %v400, %v397
  %v404 = vpack.c.bf16 %v401, %v398
  %v405 = vpack.c.bf16 %v402, %v399
  %v409 = vunpack.c.l.b16 %v403
  %v410 = vunpack.c.l.b16 %v404
  %v411 = vunpack.c.l.b16 %v405
  %v412 = vunpack.c.h.b16 %v403
  %v413 = vunpack.c.h.b16 %v404
  %v414 = vunpack.c.h.b16 %v405
  %v415 = vpack.c.b16 %v410, %v409
  %v416 = vpack.c.b16 %v411, %v411
  %v417 = vpack.c.b16 %v413, %v412
  %v418 = vpack.c.b16 %v414, %v414
  %419 = vrot.lane.b32.xlu0 %v415, 15
  %v420 = vpop.permute.xlu0 %419
  %421 = vrot.lane.b32.xlu0 %v416, 15
  %v422 = vpop.permute.xlu0 %421
  %423 = vrot.lane.b32.xlu0 %v417, 15
  %v424 = vpop.permute.xlu0 %423
  %425 = vrot.lane.b32.xlu0 %v418, 15
  %v426 = vpop.permute.xlu0 %425
  %v427 = vrot.slane %v420, 4
  %v428 = vrot.slane %v422, 4
  %v429 = vrot.slane %v424, 4
  %v430 = vrot.slane %v426, 4
  %v431 = vsel %vm259, %v427, %v428
  %vm432 = vcmask 121856
  %v433 = vsel %vm432, %v420, %v431
  %v434 = vsel %vm259, %v429, %v430
  %v435 = vsel %vm432, %v424, %v434
  %438 = vst [vmem:[#allocation3 + $0x40] sm:$0xff] %v433
  %439 = vst [vmem:[#allocation3 + $0x50] sm:$0xff] %v435
  %v440 = vld [vmem:[#allocation2 + $0x20] sm:$0xff]
  %v441 = vld [vmem:[#allocation2 + $0x28] sm:$0xf]
  %v442 = vld [vmem:[#allocation2 + $0x30] sm:$0xff]
  %v443 = vld [vmem:[#allocation2 + $0x38] sm:$0xf]
  %v444 = vunpack.c.l.bf16 %v440
  %v445 = vunpack.c.h.bf16 %v440
  %v446 = vunpack.c.l.bf16 %v441
  %v447 = vunpack.c.l.bf16 %v442
  %v448 = vunpack.c.h.bf16 %v442
  %v449 = vunpack.c.l.bf16 %v443
  %v450 = vmul.f32 %v444, %v389
  %v451 = vmul.f32 %v445, %v393
  %v452 = vmul.f32 %v446, %v391
  %v453 = vmul.f32 %v447, %v389
  %v454 = vmul.f32 %v448, %v393
  %v455 = vmul.f32 %v449, %v391
  %v456 = vpack.c.bf16 %v453, %v450
  %v457 = vpack.c.bf16 %v454, %v451
  %v458 = vpack.c.bf16 %v455, %v452
  %v462 = vunpack.c.l.b16 %v456
  %v463 = vunpack.c.l.b16 %v457
  %v464 = vunpack.c.l.b16 %v458
  %v465 = vunpack.c.h.b16 %v456
  %v466 = vunpack.c.h.b16 %v457
  %v467 = vunpack.c.h.b16 %v458
  %v468 = vpack.c.b16 %v463, %v462
  %v469 = vpack.c.b16 %v464, %v464
  %v470 = vpack.c.b16 %v466, %v465
  %v471 = vpack.c.b16 %v467, %v467
  %472 = vrot.lane.b32.xlu0 %v468, 15
  %v473 = vpop.permute.xlu0 %472
  %474 = vrot.lane.b32.xlu0 %v469, 15
  %v475 = vpop.permute.xlu0 %474
  %476 = vrot.lane.b32.xlu0 %v470, 15
  %v477 = vpop.permute.xlu0 %476
  %478 = vrot.lane.b32.xlu0 %v471, 15
  %v479 = vpop.permute.xlu0 %478
  %v480 = vrot.slane %v473, 4
  %v481 = vrot.slane %v475, 4
  %v482 = vrot.slane %v477, 4
  %v483 = vrot.slane %v479, 4
  %v484 = vsel %vm259, %v480, %v481
  %v485 = vsel %vm432, %v473, %v484
  %v486 = vsel %vm259, %v482, %v483
  %v487 = vsel %vm432, %v477, %v486
  %490 = vst [vmem:[#allocation3 + $0x48] sm:$0xff] %v485
  %491 = vst [vmem:[#allocation3 + $0x58] sm:$0xff] %v487
  %v492 = vld [vmem:[#allocation2] sm:$0xff]
  %v493 = vld [vmem:[#allocation2 + $0x8] sm:$0xf]
  %v494 = vld [vmem:[#allocation2 + $0x10] sm:$0xff]
  %v495 = vld [vmem:[#allocation2 + $0x18] sm:$0xf]
  %v496 = vunpack.c.l.bf16 %v492
  %v497 = vunpack.c.h.bf16 %v492
  %v498 = vunpack.c.l.bf16 %v493
  %v499 = vunpack.c.l.bf16 %v494
  %v500 = vunpack.c.h.bf16 %v494
  %v501 = vunpack.c.l.bf16 %v495
  %502 = vrot.lane.b32.xlu0 %v192, 127
  %v503 = vpop.permute.xlu0 %502
  %504 = vrot.lane.b32.xlu0 %v196, 127
  %v505 = vpop.permute.xlu0 %504
  %vm506 = vcmask 1039360
  %v507 = vsel %vm506, %v503, %v505
  %v511 = vmul.f32 %v496, %v503
  %v512 = vmul.f32 %v497, %v507
  %v513 = vmul.f32 %v498, %v505
  %v514 = vmul.f32 %v499, %v503
  %v515 = vmul.f32 %v500, %v507
  %v516 = vmul.f32 %v501, %v505
  %v517 = vpack.c.bf16 %v514, %v511
  %v518 = vpack.c.bf16 %v515, %v512
  %v519 = vpack.c.bf16 %v516, %v513
  %v523 = vunpack.c.l.b16 %v517
  %v524 = vunpack.c.l.b16 %v518
  %v525 = vunpack.c.l.b16 %v519
  %v526 = vunpack.c.h.b16 %v517
  %v527 = vunpack.c.h.b16 %v518
  %v528 = vunpack.c.h.b16 %v519
  %v529 = vpack.c.b16 %v524, %v523
  %v530 = vpack.c.b16 %v525, %v525
  %v531 = vpack.c.b16 %v527, %v526
  %v532 = vpack.c.b16 %v528, %v528
  %533 = vrot.lane.b32.xlu0 %v529, 1
  %v534 = vpop.permute.xlu0 %533
  %535 = vrot.lane.b32.xlu0 %v530, 1
  %v536 = vpop.permute.xlu0 %535
  %537 = vrot.lane.b32.xlu0 %v531, 1
  %v538 = vpop.permute.xlu0 %537
  %539 = vrot.lane.b32.xlu0 %v532, 1
  %v540 = vpop.permute.xlu0 %539
  %v541 = vrot.slane %v534, 4
  %v542 = vrot.slane %v536, 4
  %v543 = vrot.slane %v538, 4
  %v544 = vrot.slane %v540, 4
  %v545 = vsel %vm259, %v541, %v542
  %vm546 = vcmask 7168
  %v547 = vsel %vm546, %v534, %v545
  %v548 = vsel %vm259, %v543, %v544
  %v549 = vsel %vm546, %v538, %v548
  %552 = vst [vmem:[#allocation3 + $0x60] sm:$0xff] %v547
  %553 = vst [vmem:[#allocation3 + $0x70] sm:$0xff] %v549
  %v554 = vld [vmem:[#allocation2 + $0x20] sm:$0xff]
  %v555 = vld [vmem:[#allocation2 + $0x28] sm:$0xf]
  %v556 = vld [vmem:[#allocation2 + $0x30] sm:$0xff]
  %v557 = vld [vmem:[#allocation2 + $0x38] sm:$0xf]
  %v558 = vunpack.c.l.bf16 %v554
  %v559 = vunpack.c.h.bf16 %v554
  %v560 = vunpack.c.l.bf16 %v555
  %v561 = vunpack.c.l.bf16 %v556
  %v562 = vunpack.c.h.bf16 %v556
  %v563 = vunpack.c.l.bf16 %v557
  %v564 = vmul.f32 %v558, %v503
  %v565 = vmul.f32 %v559, %v507
  %v566 = vmul.f32 %v560, %v505
  %v567 = vmul.f32 %v561, %v503
  %v568 = vmul.f32 %v562, %v507
  %v569 = vmul.f32 %v563, %v505
  %v570 = vpack.c.bf16 %v567, %v564
  %v571 = vpack.c.bf16 %v568, %v565
  %v572 = vpack.c.bf16 %v569, %v566
  %v576 = vunpack.c.l.b16 %v570
  %v577 = vunpack.c.l.b16 %v571
  %v578 = vunpack.c.l.b16 %v572
  %v579 = vunpack.c.h.b16 %v570
  %v580 = vunpack.c.h.b16 %v571
  %v581 = vunpack.c.h.b16 %v572
  %v582 = vpack.c.b16 %v577, %v576
  %v583 = vpack.c.b16 %v578, %v578
  %v584 = vpack.c.b16 %v580, %v579
  %v585 = vpack.c.b16 %v581, %v581
  %586 = vrot.lane.b32.xlu0 %v582, 1
  %v587 = vpop.permute.xlu0 %586
  %588 = vrot.lane.b32.xlu0 %v583, 1
  %v589 = vpop.permute.xlu0 %588
  %590 = vrot.lane.b32.xlu0 %v584, 1
  %v591 = vpop.permute.xlu0 %590
  %592 = vrot.lane.b32.xlu0 %v585, 1
  %v593 = vpop.permute.xlu0 %592
  %v594 = vrot.slane %v587, 4
  %v595 = vrot.slane %v589, 4
  %v596 = vrot.slane %v591, 4
  %v597 = vrot.slane %v593, 4
  %v598 = vsel %vm259, %v594, %v595
  %v599 = vsel %vm546, %v587, %v598
  %v600 = vsel %vm259, %v596, %v597
  %v601 = vsel %vm546, %v591, %v600
  %604 = vst [vmem:[#allocation3 + $0x68] sm:$0xff] %v599
  %605 = vst [vmem:[#allocation3 + $0x78] sm:$0xff] %v601
  %v606 = vld [vmem:[#allocation2 + $0x4] sm:$0xff]
  %v607 = vld [vmem:[#allocation2 + $0x14] sm:$0xff]
  %608 = vst [vmem:[#allocation3 + $0x80] sm:$0xff] %v606
  %609 = vst [vmem:[#allocation3 + $0x90] sm:$0xff] %v607
  %v610 = vld [vmem:[#allocation2 + $0x24] sm:$0xff]
  %v611 = vld [vmem:[#allocation2 + $0x34] sm:$0xff]
  %612 = vst [vmem:[#allocation3 + $0x88] sm:$0xff] %v610
  %613 = vst [vmem:[#allocation3 + $0x98] sm:$0xff] %v611
  %v614 = vld [vmem:[#allocation2 + $0x4] sm:$0xff]
  %v615 = vld [vmem:[#allocation2 + $0xc] sm:$0xf]
  %v616 = vld [vmem:[#allocation2 + $0x14] sm:$0xff]
  %v617 = vld [vmem:[#allocation2 + $0x1c] sm:$0xf]
  %v618 = vunpack.c.l.bf16 %v614
  %v619 = vunpack.c.h.bf16 %v614
  %v620 = vunpack.c.l.bf16 %v615
  %v621 = vunpack.c.l.bf16 %v616
  %v622 = vunpack.c.h.bf16 %v616
  %v623 = vunpack.c.l.bf16 %v617
  %624 = vrot.lane.b32.xlu0 %v201, 1
  %v625 = vpop.permute.xlu0 %624
  %626 = vrot.lane.b32.xlu0 %v205, 1
  %v627 = vpop.permute.xlu0 %626
  %vm628 = vcmask 7168
  %v629 = vsel %vm628, %v625, %v627
  %v633 = vmul.f32 %v618, %v625
  %v634 = vmul.f32 %v619, %v629
  %v635 = vmul.f32 %v620, %v627
  %v636 = vmul.f32 %v621, %v625
  %v637 = vmul.f32 %v622, %v629
  %v638 = vmul.f32 %v623, %v627
  %v639 = vpack.c.bf16 %v636, %v633
  %v640 = vpack.c.bf16 %v637, %v634
  %v641 = vpack.c.bf16 %v638, %v635
  %v645 = vunpack.c.l.b16 %v639
  %v646 = vunpack.c.l.b16 %v640
  %v647 = vunpack.c.l.b16 %v641
  %v648 = vunpack.c.h.b16 %v639
  %v649 = vunpack.c.h.b16 %v640
  %v650 = vunpack.c.h.b16 %v641
  %v651 = vpack.c.b16 %v646, %v645
  %v652 = vpack.c.b16 %v647, %v647
  %v653 = vpack.c.b16 %v649, %v648
  %v654 = vpack.c.b16 %v650, %v650
  %655 = vrot.lane.b32.xlu0 %v651, 127
  %v656 = vpop.permute.xlu0 %655
  %657 = vrot.lane.b32.xlu0 %v652, 127
  %v658 = vpop.permute.xlu0 %657
  %659 = vrot.lane.b32.xlu0 %v653, 127
  %v660 = vpop.permute.xlu0 %659
  %661 = vrot.lane.b32.xlu0 %v654, 127
  %v662 = vpop.permute.xlu0 %661
  %v663 = vrot.slane %v656, 4
  %v664 = vrot.slane %v658, 4
  %v665 = vrot.slane %v660, 4
  %v666 = vrot.slane %v662, 4
  %v667 = vsel %vm259, %v663, %v664
  %vm668 = vcmask 1039360
  %v669 = vsel %vm668, %v656, %v667
  %v670 = vsel %vm259, %v665, %v666
  %v671 = vsel %vm668, %v660, %v670
  %674 = vst [vmem:[#allocation3 + $0xa0] sm:$0xff] %v669
  %675 = vst [vmem:[#allocation3 + $0xb0] sm:$0xff] %v671
  %v676 = vld [vmem:[#allocation2 + $0x24] sm:$0xff]
  %v677 = vld [vmem:[#allocation2 + $0x2c] sm:$0xf]
  %v678 = vld [vmem:[#allocation2 + $0x34] sm:$0xff]
  %v679 = vld [vmem:[#allocation2 + $0x3c] sm:$0xf]
  %v680 = vunpack.c.l.bf16 %v676
  %v681 = vunpack.c.h.bf16 %v676
  %v682 = vunpack.c.l.bf16 %v677
  %v683 = vunpack.c.l.bf16 %v678
  %v684 = vunpack.c.h.bf16 %v678
  %v685 = vunpack.c.l.bf16 %v679
  %v686 = vmul.f32 %v680, %v625
  %v687 = vmul.f32 %v681, %v629
  %v688 = vmul.f32 %v682, %v627
  %v689 = vmul.f32 %v683, %v625
  %v690 = vmul.f32 %v684, %v629
  %v691 = vmul.f32 %v685, %v627
  %v692 = vpack.c.bf16 %v689, %v686
  %v693 = vpack.c.bf16 %v690, %v687
  %v694 = vpack.c.bf16 %v691, %v688
  %v698 = vunpack.c.l.b16 %v692
  %v699 = vunpack.c.l.b16 %v693
  %v700 = vunpack.c.l.b16 %v694
  %v701 = vunpack.c.h.b16 %v692
  %v702 = vunpack.c.h.b16 %v693
  %v703 = vunpack.c.h.b16 %v694
  %v704 = vpack.c.b16 %v699, %v698
  %v705 = vpack.c.b16 %v700, %v700
  %v706 = vpack.c.b16 %v702, %v701
  %v707 = vpack.c.b16 %v703, %v703
  %708 = vrot.lane.b32.xlu0 %v704, 127
  %v709 = vpop.permute.xlu0 %708
  %710 = vrot.lane.b32.xlu0 %v705, 127
  %v711 = vpop.permute.xlu0 %710
  %712 = vrot.lane.b32.xlu0 %v706, 127
  %v713 = vpop.permute.xlu0 %712
  %714 = vrot.lane.b32.xlu0 %v707, 127
  %v715 = vpop.permute.xlu0 %714
  %v716 = vrot.slane %v709, 4
  %v717 = vrot.slane %v711, 4
  %v718 = vrot.slane %v713, 4
  %v719 = vrot.slane %v715, 4
  %v720 = vsel %vm259, %v716, %v717
  %v721 = vsel %vm668, %v709, %v720
  %v722 = vsel %vm259, %v718, %v719
  %v723 = vsel %vm668, %v713, %v722
  %726 = vst [vmem:[#allocation3 + $0xa8] sm:$0xff] %v721
  %727 = vst [vmem:[#allocation3 + $0xb8] sm:$0xff] %v723
  %v728 = vld [vmem:[#allocation2 + $0x4] sm:$0xff]
  %v729 = vld [vmem:[#allocation2 + $0xc] sm:$0xf]
  %v730 = vld [vmem:[#allocation2 + $0x14] sm:$0xff]
  %v731 = vld [vmem:[#allocation2 + $0x1c] sm:$0xf]
  %v732 = vunpack.c.l.bf16 %v728
  %v733 = vunpack.c.h.bf16 %v728
  %v734 = vunpack.c.l.bf16 %v729
  %v735 = vunpack.c.l.bf16 %v730
  %v736 = vunpack.c.h.bf16 %v730
  %v737 = vunpack.c.l.bf16 %v731
  %738 = vrot.lane.b32.xlu0 %v192, 15
  %v739 = vpop.permute.xlu0 %738
  %740 = vrot.lane.b32.xlu0 %v196, 15
  %v741 = vpop.permute.xlu0 %740
  %vm742 = vcmask 121856
  %v743 = vsel %vm742, %v739, %v741
  %v747 = vmul.f32 %v732, %v739
  %v748 = vmul.f32 %v733, %v743
  %v749 = vmul.f32 %v734, %v741
  %v750 = vmul.f32 %v735, %v739
  %v751 = vmul.f32 %v736, %v743
  %v752 = vmul.f32 %v737, %v741
  %v753 = vpack.c.bf16 %v750, %v747
  %v754 = vpack.c.bf16 %v751, %v748
  %v755 = vpack.c.bf16 %v752, %v749
  %v759 = vunpack.c.l.b16 %v753
  %v760 = vunpack.c.l.b16 %v754
  %v761 = vunpack.c.l.b16 %v755
  %v762 = vunpack.c.h.b16 %v753
  %v763 = vunpack.c.h.b16 %v754
  %v764 = vunpack.c.h.b16 %v755
  %v765 = vpack.c.b16 %v760, %v759
  %v766 = vpack.c.b16 %v761, %v761
  %v767 = vpack.c.b16 %v763, %v762
  %v768 = vpack.c.b16 %v764, %v764
  %769 = vrot.lane.b32.xlu0 %v765, 113
  %v770 = vpop.permute.xlu0 %769
  %771 = vrot.lane.b32.xlu0 %v766, 113
  %v772 = vpop.permute.xlu0 %771
  %773 = vrot.lane.b32.xlu0 %v767, 113
  %v774 = vpop.permute.xlu0 %773
  %775 = vrot.lane.b32.xlu0 %v768, 113
  %v776 = vpop.permute.xlu0 %775
  %v777 = vrot.slane %v770, 4
  %v778 = vrot.slane %v772, 4
  %v779 = vrot.slane %v774, 4
  %v780 = vrot.slane %v776, 4
  %v781 = vsel %vm259, %v777, %v778
  %vm782 = vcmask 924672
  %v783 = vsel %vm782, %v770, %v781
  %v784 = vsel %vm259, %v779, %v780
  %v785 = vsel %vm782, %v774, %v784
  %788 = vst [vmem:[#allocation3 + $0xc0] sm:$0xff] %v783
  %789 = vst [vmem:[#allocation3 + $0xd0] sm:$0xff] %v785
  %v790 = vld [vmem:[#allocation2 + $0x24] sm:$0xff]
  %v791 = vld [vmem:[#allocation2 + $0x2c] sm:$0xf]
  %v792 = vld [vmem:[#allocation2 + $0x34] sm:$0xff]
  %v793 = vld [vmem:[#allocation2 + $0x3c] sm:$0xf]
  %v794 = vunpack.c.l.bf16 %v790
  %v795 = vunpack.c.h.bf16 %v790
  %v796 = vunpack.c.l.bf16 %v791
  %v797 = vunpack.c.l.bf16 %v792
  %v798 = vunpack.c.h.bf16 %v792
  %v799 = vunpack.c.l.bf16 %v793
  %v800 = vmul.f32 %v794, %v739
  %v801 = vmul.f32 %v795, %v743
  %v802 = vmul.f32 %v796, %v741
  %v803 = vmul.f32 %v797, %v739
  %v804 = vmul.f32 %v798, %v743
  %v805 = vmul.f32 %v799, %v741
  %v806 = vpack.c.bf16 %v803, %v800
  %v807 = vpack.c.bf16 %v804, %v801
  %v808 = vpack.c.bf16 %v805, %v802
  %v812 = vunpack.c.l.b16 %v806
  %v813 = vunpack.c.l.b16 %v807
  %v814 = vunpack.c.l.b16 %v808
  %v815 = vunpack.c.h.b16 %v806
  %v816 = vunpack.c.h.b16 %v807
  %v817 = vunpack.c.h.b16 %v808
  %v818 = vpack.c.b16 %v813, %v812
  %v819 = vpack.c.b16 %v814, %v814
  %v820 = vpack.c.b16 %v816, %v815
  %v821 = vpack.c.b16 %v817, %v817
  %822 = vrot.lane.b32.xlu0 %v818, 113
  %v823 = vpop.permute.xlu0 %822
  %824 = vrot.lane.b32.xlu0 %v819, 113
  %v825 = vpop.permute.xlu0 %824
  %826 = vrot.lane.b32.xlu0 %v820, 113
  %v827 = vpop.permute.xlu0 %826
  %828 = vrot.lane.b32.xlu0 %v821, 113
  %v829 = vpop.permute.xlu0 %828
  %v830 = vrot.slane %v823, 4
  %v831 = vrot.slane %v825, 4
  %v832 = vrot.slane %v827, 4
  %v833 = vrot.slane %v829, 4
  %v834 = vsel %vm259, %v830, %v831
  %v835 = vsel %vm782, %v823, %v834
  %v836 = vsel %vm259, %v832, %v833
  %v837 = vsel %vm782, %v827, %v836
  %840 = vst [vmem:[#allocation3 + $0xc8] sm:$0xff] %v835
  %841 = vst [vmem:[#allocation3 + $0xd8] sm:$0xff] %v837
  %v842 = vld [vmem:[#allocation2 + $0x4] sm:$0xff]
  %v843 = vld [vmem:[#allocation2 + $0xc] sm:$0xf]
  %v844 = vld [vmem:[#allocation2 + $0x14] sm:$0xff]
  %v845 = vld [vmem:[#allocation2 + $0x1c] sm:$0xf]
  %850 = vrot.lane.b32.xlu0 %v842, 112
  %v851 = vpop.permute.xlu0 %850
  %852 = vrot.lane.b32.xlu0 %v843, 112
  %v853 = vpop.permute.xlu0 %852
  %854 = vrot.lane.b32.xlu0 %v844, 112
  %v855 = vpop.permute.xlu0 %854
  %856 = vrot.lane.b32.xlu0 %v845, 112
  %v857 = vpop.permute.xlu0 %856
  %v858 = vrot.slane %v851, 4
  %v859 = vrot.slane %v853, 4
  %v860 = vrot.slane %v855, 4
  %v861 = vrot.slane %v857, 4
  %v862 = vsel %vm259, %v858, %v859
  %vm863 = vcmask 916480
  %v864 = vsel %vm863, %v851, %v862
  %v865 = vsel %vm259, %v860, %v861
  %v866 = vsel %vm863, %v855, %v865
  %869 = vst [vmem:[#allocation3 + $0xe0] sm:$0xff] %v864
  %870 = vst [vmem:[#allocation3 + $0xf0] sm:$0xff] %v866
  %v871 = vld [vmem:[#allocation2 + $0x24] sm:$0xff]
  %v872 = vld [vmem:[#allocation2 + $0x2c] sm:$0xf]
  %v873 = vld [vmem:[#allocation2 + $0x34] sm:$0xff]
  %v874 = vld [vmem:[#allocation2 + $0x3c] sm:$0xf]
  %879 = vrot.lane.b32.xlu0 %v871, 112
  %v880 = vpop.permute.xlu0 %879
  %881 = vrot.lane.b32.xlu0 %v872, 112
  %v882 = vpop.permute.xlu0 %881
  %883 = vrot.lane.b32.xlu0 %v873, 112
  %v884 = vpop.permute.xlu0 %883
  %885 = vrot.lane.b32.xlu0 %v874, 112
  %v886 = vpop.permute.xlu0 %885
  %v887 = vrot.slane %v880, 4
  %v888 = vrot.slane %v882, 4
  %v889 = vrot.slane %v884, 4
  %v890 = vrot.slane %v886, 4
  %v891 = vsel %vm259, %v887, %v888
  %v892 = vsel %vm863, %v880, %v891
  %v893 = vsel %vm259, %v889, %v890
  %v894 = vsel %vm863, %v884, %v893
  %897 = vst [vmem:[#allocation3 + $0xe8] sm:$0xff] %v892
  %898 = vst [vmem:[#allocation3 + $0xf8] sm:$0xff] %v894
  %v899 = vld [vmem:[#allocation2 + $0x4] sm:$0xff]
  %v900 = vld [vmem:[#allocation2 + $0xc] sm:$0xf]
  %v901 = vld [vmem:[#allocation2 + $0x14] sm:$0xff]
  %v902 = vld [vmem:[#allocation2 + $0x1c] sm:$0xf]
  %v903 = vunpack.c.l.bf16 %v899
  %v904 = vunpack.c.h.bf16 %v899
  %v905 = vunpack.c.l.bf16 %v900
  %v906 = vunpack.c.l.bf16 %v901
  %v907 = vunpack.c.h.bf16 %v901
  %v908 = vunpack.c.l.bf16 %v902
  %909 = vrot.lane.b32.xlu0 %v201, 17
  %v910 = vpop.permute.xlu0 %909
  %911 = vrot.lane.b32.xlu0 %v205, 17
  %v912 = vpop.permute.xlu0 %911
  %vm913 = vcmask 138240
  %v914 = vsel %vm913, %v910, %v912
  %v918 = vmul.f32 %v903, %v910
  %v919 = vmul.f32 %v904, %v914
  %v920 = vmul.f32 %v905, %v912
  %v921 = vmul.f32 %v906, %v910
  %v922 = vmul.f32 %v907, %v914
  %v923 = vmul.f32 %v908, %v912
  %v924 = vpack.c.bf16 %v921, %v918
  %v925 = vpack.c.bf16 %v922, %v919
  %v926 = vpack.c.bf16 %v923, %v920
  %v930 = vunpack.c.l.b16 %v924
  %v931 = vunpack.c.l.b16 %v925
  %v932 = vunpack.c.l.b16 %v926
  %v933 = vunpack.c.h.b16 %v924
  %v934 = vunpack.c.h.b16 %v925
  %v935 = vunpack.c.h.b16 %v926
  %v936 = vpack.c.b16 %v931, %v930
  %v937 = vpack.c.b16 %v932, %v932
  %v938 = vpack.c.b16 %v934, %v933
  %v939 = vpack.c.b16 %v935, %v935
  %940 = vrot.lane.b32.xlu0 %v936, 111
  %v941 = vpop.permute.xlu0 %940
  %942 = vrot.lane.b32.xlu0 %v937, 111
  %v943 = vpop.permute.xlu0 %942
  %944 = vrot.lane.b32.xlu0 %v938, 111
  %v945 = vpop.permute.xlu0 %944
  %946 = vrot.lane.b32.xlu0 %v939, 111
  %v947 = vpop.permute.xlu0 %946
  %v948 = vrot.slane %v941, 4
  %v949 = vrot.slane %v943, 4
  %v950 = vrot.slane %v945, 4
  %v951 = vrot.slane %v947, 4
  %v952 = vsel %vm259, %v948, %v949
  %vm953 = vcmask 908288
  %v954 = vsel %vm953, %v941, %v952
  %v955 = vsel %vm259, %v950, %v951
  %v956 = vsel %vm953, %v945, %v955
  %959 = vst [vmem:[#allocation3 + $0x100] sm:$0xff] %v954
  %960 = vst [vmem:[#allocation3 + $0x110] sm:$0xff] %v956
  %v961 = vld [vmem:[#allocation2 + $0x24] sm:$0xff]
  %v962 = vld [vmem:[#allocation2 + $0x2c] sm:$0xf]
  %v963 = vld [vmem:[#allocation2 + $0x34] sm:$0xff]
  %v964 = vld [vmem:[#allocation2 + $0x3c] sm:$0xf]
  %v965 = vunpack.c.l.bf16 %v961
  %v966 = vunpack.c.h.bf16 %v961
  %v967 = vunpack.c.l.bf16 %v962
  %v968 = vunpack.c.l.bf16 %v963
  %v969 = vunpack.c.h.bf16 %v963
  %v970 = vunpack.c.l.bf16 %v964
  %v971 = vmul.f32 %v965, %v910
  %v972 = vmul.f32 %v966, %v914
  %v973 = vmul.f32 %v967, %v912
  %v974 = vmul.f32 %v968, %v910
  %v975 = vmul.f32 %v969, %v914
  %v976 = vmul.f32 %v970, %v912
  %v977 = vpack.c.bf16 %v974, %v971
  %v978 = vpack.c.bf16 %v975, %v972
  %v979 = vpack.c.bf16 %v976, %v973
  %v983 = vunpack.c.l.b16 %v977
  %v984 = vunpack.c.l.b16 %v978
  %v985 = vunpack.c.l.b16 %v979
  %v986 = vunpack.c.h.b16 %v977
  %v987 = vunpack.c.h.b16 %v978
  %v988 = vunpack.c.h.b16 %v979
  %v989 = vpack.c.b16 %v984, %v983
  %v990 = vpack.c.b16 %v985, %v985
  %v991 = vpack.c.b16 %v987, %v986
  %v992 = vpack.c.b16 %v988, %v988
  %993 = vrot.lane.b32.xlu0 %v989, 111
  %v994 = vpop.permute.xlu0 %993
  %995 = vrot.lane.b32.xlu0 %v990, 111
  %v996 = vpop.permute.xlu0 %995
  %997 = vrot.lane.b32.xlu0 %v991, 111
  %v998 = vpop.permute.xlu0 %997
  %999 = vrot.lane.b32.xlu0 %v992, 111
  %v1000 = vpop.permute.xlu0 %999
  %v1001 = vrot.slane %v994, 4
  %v1002 = vrot.slane %v996, 4
  %v1003 = vrot.slane %v998, 4
  %v1004 = vrot.slane %v1000, 4
  %v1005 = vsel %vm259, %v1001, %v1002
  %v1006 = vsel %vm953, %v994, %v1005
  %v1007 = vsel %vm259, %v1003, %v1004
  %v1008 = vsel %vm953, %v998, %v1007
  %1011 = vst [vmem:[#allocation3 + $0x108] sm:$0xff] %v1006
  %1012 = vst [vmem:[#allocation3 + $0x118] sm:$0xff] %v1008
  %v1013 = vld [vmem:[%s5] sm:$0xff]
  %v1014 = vld [vmem:[%s5 + $0x8] sm:$0xff]
  %v1015 = vld [vmem:[#allocation3] sm:$0xff]
  %v1016 = vld [vmem:[#allocation3 + $0x8] sm:$0xff]
  %v1017 = vld [vmem:[#allocation3 + $0x10] sm:$0xff]
  %v1018 = vld [vmem:[#allocation3 + $0x18] sm:$0xff]
  %v1019 = vld [vmem:[#allocation3 + $0x20] sm:$0xff]
  %v1020 = vld [vmem:[#allocation3 + $0x28] sm:$0xff]
  %v1021 = vld [vmem:[#allocation3 + $0x30] sm:$0xff]
  %v1022 = vld [vmem:[#allocation3 + $0x38] sm:$0xff]
  %v1023 = vld [vmem:[#allocation3 + $0x40] sm:$0xff]
  %v1024 = vld [vmem:[#allocation3 + $0x48] sm:$0xff]
  %v1025 = vld [vmem:[#allocation3 + $0x50] sm:$0xff]
  %v1026 = vld [vmem:[#allocation3 + $0x58] sm:$0xff]
  %v1027 = vld [vmem:[#allocation3 + $0x60] sm:$0xff]
  %v1028 = vld [vmem:[#allocation3 + $0x68] sm:$0xff]
  %v1029 = vld [vmem:[#allocation3 + $0x70] sm:$0xff]
  %v1030 = vld [vmem:[#allocation3 + $0x78] sm:$0xff]
  %v1031 = vld [vmem:[#allocation3 + $0x80] sm:$0xff]
  %v1032 = vld [vmem:[#allocation3 + $0x88] sm:$0xff]
  %v1033 = vld [vmem:[#allocation3 + $0x90] sm:$0xff]
  %v1034 = vld [vmem:[#allocation3 + $0x98] sm:$0xff]
  %v1035 = vld [vmem:[#allocation3 + $0xa0] sm:$0xff]
  %v1036 = vld [vmem:[#allocation3 + $0xa8] sm:$0xff]
  %v1037 = vld [vmem:[#allocation3 + $0xb0] sm:$0xff]
  %v1038 = vld [vmem:[#allocation3 + $0xb8] sm:$0xff]
  %v1039 = vld [vmem:[#allocation3 + $0xc0] sm:$0xff]
  %v1040 = vld [vmem:[#allocation3 + $0xc8] sm:$0xff]
  %v1041 = vld [vmem:[#allocation3 + $0xd0] sm:$0xff]
  %v1042 = vld [vmem:[#allocation3 + $0xd8] sm:$0xff]
  %v1043 = vld [vmem:[#allocation3 + $0xe0] sm:$0xff]
  %v1044 = vld [vmem:[#allocation3 + $0xe8] sm:$0xff]
  %v1045 = vld [vmem:[#allocation3 + $0xf0] sm:$0xff]
  %v1046 = vld [vmem:[#allocation3 + $0xf8] sm:$0xff]
  %v1047 = vld [vmem:[#allocation3 + $0x100] sm:$0xff]
  %v1048 = vld [vmem:[#allocation3 + $0x108] sm:$0xff]
  %v1049 = vld [vmem:[#allocation3 + $0x110] sm:$0xff]
  %v1050 = vld [vmem:[#allocation3 + $0x118] sm:$0xff]
  %v1051 = vpack.c.bf16 %v1013, %v1013
  %v1052 = vpack.c.bf16 %v1014, %v1014
  %v1089 = vunpack.c.l.b16 %v1015
  %v1090 = vunpack.c.h.b16 %v1015
  %v1091 = vunpack.c.l.b16 %v1016
  %v1092 = vunpack.c.h.b16 %v1016
  %v1093 = vunpack.c.l.b16 %v1017
  %v1094 = vunpack.c.h.b16 %v1017
  %v1095 = vunpack.c.l.b16 %v1018
  %v1096 = vunpack.c.h.b16 %v1018
  %v1097 = vunpack.c.l.b16 %v1019
  %v1098 = vunpack.c.h.b16 %v1019
  %v1099 = vunpack.c.l.b16 %v1020
  %v1100 = vunpack.c.h.b16 %v1020
  %v1101 = vunpack.c.l.b16 %v1021
  %v1102 = vunpack.c.h.b16 %v1021
  %v1103 = vunpack.c.l.b16 %v1022
  %v1104 = vunpack.c.h.b16 %v1022
  %v1105 = vunpack.c.l.b16 %v1023
  %v1106 = vunpack.c.h.b16 %v1023
  %v1107 = vunpack.c.l.b16 %v1024
  %v1108 = vunpack.c.h.b16 %v1024
  %v1109 = vunpack.c.l.b16 %v1025
  %v1110 = vunpack.c.h.b16 %v1025
  %v1111 = vunpack.c.l.b16 %v1026
  %v1112 = vunpack.c.h.b16 %v1026
  %v1113 = vunpack.c.l.b16 %v1027
  %v1114 = vunpack.c.h.b16 %v1027
  %v1115 = vunpack.c.l.b16 %v1028
  %v1116 = vunpack.c.h.b16 %v1028
  %v1117 = vunpack.c.l.b16 %v1029
  %v1118 = vunpack.c.h.b16 %v1029
  %v1119 = vunpack.c.l.b16 %v1030
  %v1120 = vunpack.c.h.b16 %v1030
  %v1121 = vunpack.c.l.b16 %v1031
  %v1122 = vunpack.c.h.b16 %v1031
  %v1123 = vunpack.c.l.b16 %v1032
  %v1124 = vunpack.c.h.b16 %v1032
  %v1125 = vunpack.c.l.b16 %v1033
  %v1126 = vunpack.c.h.b16 %v1033
  %v1127 = vunpack.c.l.b16 %v1034
  %v1128 = vunpack.c.h.b16 %v1034
  %v1129 = vunpack.c.l.b16 %v1035
  %v1130 = vunpack.c.h.b16 %v1035
  %v1131 = vunpack.c.l.b16 %v1036
  %v1132 = vunpack.c.h.b16 %v1036
  %v1133 = vunpack.c.l.b16 %v1037
  %v1134 = vunpack.c.h.b16 %v1037
  %v1135 = vunpack.c.l.b16 %v1038
  %v1136 = vunpack.c.h.b16 %v1038
  %v1137 = vunpack.c.l.b16 %v1039
  %v1138 = vunpack.c.h.b16 %v1039
  %v1139 = vunpack.c.l.b16 %v1040
  %v1140 = vunpack.c.h.b16 %v1040
  %v1141 = vunpack.c.l.b16 %v1041
  %v1142 = vunpack.c.h.b16 %v1041
  %v1143 = vunpack.c.l.b16 %v1042
  %v1144 = vunpack.c.h.b16 %v1042
  %v1145 = vunpack.c.l.b16 %v1043
  %v1146 = vunpack.c.h.b16 %v1043
  %v1147 = vunpack.c.l.b16 %v1044
  %v1148 = vunpack.c.h.b16 %v1044
  %v1149 = vunpack.c.l.b16 %v1045
  %v1150 = vunpack.c.h.b16 %v1045
  %v1151 = vunpack.c.l.b16 %v1046
  %v1152 = vunpack.c.h.b16 %v1046
  %v1153 = vunpack.c.l.b16 %v1047
  %v1154 = vunpack.c.h.b16 %v1047
  %v1155 = vunpack.c.l.b16 %v1048
  %v1156 = vunpack.c.h.b16 %v1048
  %v1157 = vunpack.c.l.b16 %v1049
  %v1158 = vunpack.c.h.b16 %v1049
  %v1159 = vunpack.c.l.b16 %v1050
  %v1160 = vunpack.c.h.b16 %v1050
  %v1161 = vpack.c.b16 %v1093, %v1089
  %v1162 = vpack.c.b16 %v1094, %v1090
  %v1163 = vpack.c.b16 %v1095, %v1091
  %v1164 = vpack.c.b16 %v1096, %v1092
  %v1165 = vpack.c.b16 %v1101, %v1097
  %v1166 = vpack.c.b16 %v1102, %v1098
  %v1167 = vpack.c.b16 %v1103, %v1099
  %v1168 = vpack.c.b16 %v1104, %v1100
  %v1169 = vpack.c.b16 %v1109, %v1105
  %v1170 = vpack.c.b16 %v1110, %v1106
  %v1171 = vpack.c.b16 %v1111, %v1107
  %v1172 = vpack.c.b16 %v1112, %v1108
  %v1173 = vpack.c.b16 %v1117, %v1113
  %v1174 = vpack.c.b16 %v1118, %v1114
  %v1175 = vpack.c.b16 %v1119, %v1115
  %v1176 = vpack.c.b16 %v1120, %v1116
  %v1177 = vpack.c.b16 %v1125, %v1121
  %v1178 = vpack.c.b16 %v1126, %v1122
  %v1179 = vpack.c.b16 %v1127, %v1123
  %v1180 = vpack.c.b16 %v1128, %v1124
  %v1181 = vpack.c.b16 %v1133, %v1129
  %v1182 = vpack.c.b16 %v1134, %v1130
  %v1183 = vpack.c.b16 %v1135, %v1131
  %v1184 = vpack.c.b16 %v1136, %v1132
  %v1185 = vpack.c.b16 %v1141, %v1137
  %v1186 = vpack.c.b16 %v1142, %v1138
  %v1187 = vpack.c.b16 %v1143, %v1139
  %v1188 = vpack.c.b16 %v1144, %v1140
  %v1189 = vpack.c.b16 %v1149, %v1145
  %v1190 = vpack.c.b16 %v1150, %v1146
  %v1191 = vpack.c.b16 %v1151, %v1147
  %v1192 = vpack.c.b16 %v1152, %v1148
  %v1193 = vpack.c.b16 %v1157, %v1153
  %v1194 = vpack.c.b16 %v1158, %v1154
  %v1195 = vpack.c.b16 %v1159, %v1155
  %v1196 = vpack.c.b16 %v1160, %v1156
  %vm1233 = vcmask 130048
  %v1235 = vsel %vm1233, %v1052, 0
  %1237 = vmatprep.subr.bf16.mxu0 %v1190
  %1238 = vmatpush1.bf16.msra.mxu0 %v1189
  %1239 = vmatprep.subr.bf16.mxu0 %v1186
  %1240 = vmatpush1.bf16.msra.mxu0 %v1185
  %1241 = vmatprep.subr.bf16.mxu0 %v1182
  %1242 = vmatpush1.bf16.msra.mxu0 %v1181
  %1243 = vmatprep.subr.bf16.mxu0 %v1178
  %1244 = vmatpush1.bf16.msra.mxu0 %v1177
  %1245 = vmatprep.subr.bf16.mxu0 %v1174
  %1246 = vmatpush1.bf16.msra.mxu0 %v1173
  %1247 = vmatprep.subr.bf16.mxu0 %v1170
  %1248 = vmatpush1.bf16.msra.mxu0 %v1169
  %1249 = vmatprep.subr.bf16.mxu0 %v1166
  %1250 = vmatpush1.bf16.msra.mxu0 %v1165
  %1251 = vmatprep.subr.bf16.mxu0 %v1162
  %1252 = vmatpush1.bf16.msra.mxu0 %v1161
  %1253 = vmatprep.subr.bf16.mxu0 0
  %1254 = vmatpush2.bf16.msra.mxu0 0
  %1255 = vmatprep.subr.bf16.mxu0 0
  %1256 = vmatpush2.bf16.msra.mxu0 0
  %1257 = vmatprep.subr.bf16.mxu0 0
  %1258 = vmatpush2.bf16.msra.mxu0 0
  %1259 = vmatprep.subr.bf16.mxu0 0
  %1260 = vmatpush2.bf16.msra.mxu0 0
  %1261 = vmatprep.subr.bf16.mxu0 0
  %1262 = vmatpush2.bf16.msra.mxu0 0
  %1263 = vmatprep.subr.bf16.mxu0 0
  %1264 = vmatpush2.bf16.msra.mxu0 0
  %1265 = vmatprep.subr.bf16.mxu0 0
  %1266 = vmatpush2.bf16.msra.mxu0 0
  %1267 = vmatprep.subr.bf16.mxu0 %v1194
  %1268 = vmatpush2.bf16.msra.mxu0 %v1193
  %1269 = vmatprep.mubr.bf16.mxu0 %v1235
  %1270 = vmatmul.mubr.bf16.gmra.mxu0 %v1051
  %v1271 = vpop.f32.mrf.mxu0
  %v1272 = vadd.f32 0.0, %v1271
  %v1273 = vpop.f32.mrf.mxu0
  %v1274 = vadd.f32 0.0, %v1273
  %v1275 = vpop.f32.mrf.mxu0
  %v1276 = vpop.f32.mrf.mxu0
  %1277 = vdwg.mxu0
  %1278 = vmatprep.subr.bf16.mxu0 %v1192
  %1279 = vmatpush1.bf16.msra.mxu0 %v1191
  %1280 = vmatprep.subr.bf16.mxu0 %v1188
  %1281 = vmatpush1.bf16.msra.mxu0 %v1187
  %1282 = vmatprep.subr.bf16.mxu0 %v1184
  %1283 = vmatpush1.bf16.msra.mxu0 %v1183
  %1284 = vmatprep.subr.bf16.mxu0 %v1180
  %1285 = vmatpush1.bf16.msra.mxu0 %v1179
  %1286 = vmatprep.subr.bf16.mxu0 %v1176
  %1287 = vmatpush1.bf16.msra.mxu0 %v1175
  %1288 = vmatprep.subr.bf16.mxu0 %v1172
  %1289 = vmatpush1.bf16.msra.mxu0 %v1171
  %1290 = vmatprep.subr.bf16.mxu0 %v1168
  %1291 = vmatpush1.bf16.msra.mxu0 %v1167
  %1292 = vmatprep.subr.bf16.mxu0 %v1164
  %1293 = vmatpush1.bf16.msra.mxu0 %v1163
  %1294 = vmatprep.subr.bf16.mxu0 0
  %1295 = vmatpush2.bf16.msra.mxu0 0
  %1296 = vmatprep.subr.bf16.mxu0 0
  %1297 = vmatpush2.bf16.msra.mxu0 0
  %1298 = vmatprep.subr.bf16.mxu0 0
  %1299 = vmatpush2.bf16.msra.mxu0 0
  %1300 = vmatprep.subr.bf16.mxu0 0
  %1301 = vmatpush2.bf16.msra.mxu0 0
  %1302 = vmatprep.subr.bf16.mxu0 0
  %1303 = vmatpush2.bf16.msra.mxu0 0
  %1304 = vmatprep.subr.bf16.mxu0 0
  %1305 = vmatpush2.bf16.msra.mxu0 0
  %1306 = vmatprep.subr.bf16.mxu0 0
  %1307 = vmatpush2.bf16.msra.mxu0 0
  %1308 = vmatprep.subr.bf16.mxu0 %v1196
  %1309 = vmatpush2.bf16.msra.mxu0 %v1195
  %1310 = vmatprep.mubr.bf16.mxu0 %v1235
  %1311 = vmatmul.mubr.bf16.gmra.mxu0 %v1051
  %v1312 = vpop.f32.mrf.mxu0
  %v1313 = vadd.f32 0.0, %v1312
  %v1314 = vpop.f32.mrf.mxu0
  %v1315 = vadd.f32 0.0, %v1314
  %v1316 = vpop.f32.mrf.mxu0
  %v1317 = vpop.f32.mrf.mxu0
  %1318 = vdwg.mxu0
  %v1319 = vld [vmem:[%s6] sm:$0xff]
  %v1320 = vld [vmem:[%s7] sm:$0xff]
  %v1321 = vadd.f32 %v1272, %v1274
  %v1322 = vadd.f32 %v1321, %v1313
  %v1323 = vadd.f32 %v1322, %v1315
  %1324 = vadd.xlane.f32.xlu0 %v1323
  %v1325 = vpop.xlane.xlu0 %1324
  %v1326 = vmul.f32 %v1325, 0.001953125
  %v1327 = vmul.f32 %v1272, %v1272
  %v1328 = vmul.f32 %v1274, %v1274
  %v1329 = vmul.f32 %v1313, %v1313
  %v1330 = vmul.f32 %v1315, %v1315
  %v1331 = vadd.f32 %v1327, %v1328
  %v1332 = vadd.f32 %v1331, %v1329
  %v1333 = vadd.f32 %v1332, %v1330
  %1334 = vadd.xlane.f32.xlu0 %v1333
  %v1335 = vpop.xlane.xlu0 %1334
  %v1336 = vmul.f32 %v1335, 0.001953125
  %v1337 = vmul.f32 %v1326, %v1326
  %v1338 = vsub.f32 %v1336, %v1337
  %v1339 = vadd.f32 %v1338, 1e-05
  %v1340 = vrsqrt.pop %v1339
  %v1341 = vmul.f32 %v1319, %v1340
  %v1342 = vmul.f32 %v1326, %v1341
  %v1343 = vsub.f32 %v1320, %v1342
  %1345 = vset.pattern.permute.xlu0 0
  %1346 = vperm.xlu0 %1345, %v1341
  %v1347 = vpop.permute.xlu0 %1346
  %v1349 = vmul.f32 %v1272, %v1347
  %v1350 = vmul.f32 %v1274, %v1347
  %v1351 = vmul.f32 %v1313, %v1347
  %v1352 = vmul.f32 %v1315, %v1347
  %1354 = vset.pattern.permute.xlu0 0
  %1355 = vperm.xlu0 %1354, %v1343
  %v1356 = vpop.permute.xlu0 %1355
  %v1358 = vadd.f32 %v1349, %v1356
  %v1359 = vadd.f32 %v1350, %v1356
  %v1360 = vadd.f32 %v1351, %v1356
  %v1361 = vadd.f32 %v1352, %v1356
  %v1362 = vmax.f32 %v1358, 0.0
  %v1363 = vmax.f32 %v1359, 0.0
  %v1364 = vmax.f32 %v1360, 0.0
  %v1365 = vmax.f32 %v1361, 0.0
  %v1366 = vpack.c.bf16 %v1362, %v1362
  %v1367 = vpack.c.bf16 %v1363, %v1363
  %v1370 = vunpack.c.l.b16 %v1366
  %v1371 = vunpack.c.l.b16 %v1367
  %v1372 = vpack.c.b16 %v1371, %v1370
  %1374 = vst [vmem:[#allocation2 + $0x4] sm:$0xff] %v1372
  %v1375 = vpack.c.bf16 %v1364, %v1364
  %v1376 = vpack.c.bf16 %v1365, %v1365
  %v1379 = vunpack.c.l.b16 %v1375
  %v1380 = vunpack.c.l.b16 %v1376
  %v1381 = vpack.c.b16 %v1380, %v1379
  %1383 = vst [vmem:[#allocation2 + $0x14] sm:$0xff] %v1381
  %v1384 = vld [vmem:[#allocation2] sm:$0xff]
  %v1385 = vld [vmem:[#allocation2 + $0x8] sm:$0xf]
  %v1386 = vunpack.c.l.bf16 %v1384
  %v1387 = vunpack.c.h.bf16 %v1384
  %v1388 = vunpack.c.l.bf16 %v1385
  %v1389 = vmul.f32 %v1386, %v217
  %v1390 = vmul.f32 %v1387, %v221
  %v1391 = vmul.f32 %v1388, %v219
  %v1392 = vpack.c.bf16 %v1389, %v1389
  %v1393 = vpack.c.bf16 %v1390, %v1390
  %v1394 = vpack.c.bf16 %v1391, %v1391
  %v1398 = vunpack.c.l.b16 %v1392
  %v1399 = vunpack.c.l.b16 %v1393
  %v1400 = vunpack.c.l.b16 %v1394
  %v1401 = vpack.c.b16 %v1399, %v1398
  %v1402 = vpack.c.b16 %v1400, %v1400
  %1403 = vrot.lane.b32.xlu0 %v1401, 17
  %v1404 = vpop.permute.xlu0 %1403
  %1405 = vrot.lane.b32.xlu0 %v1402, 17
  %v1406 = vpop.permute.xlu0 %1405
  %v1407 = vrot.slane %v1404, 4
  %v1408 = vrot.slane %v1406, 4
  %v1409 = vsel %vm259, %v1407, %v1408
  %v1410 = vsel %vm261, %v1404, %v1409
  %1412 = vst [vmem:[#allocation3] sm:$0xff] %v1410
  %v1413 = vld [vmem:[#allocation2 + $0x10] sm:$0xff]
  %v1414 = vld [vmem:[#allocation2 + $0x18] sm:$0xf]
  %v1415 = vunpack.c.l.bf16 %v1413
  %v1416 = vunpack.c.h.bf16 %v1413
  %v1417 = vunpack.c.l.bf16 %v1414
  %v1418 = vmul.f32 %v1415, %v217
  %v1419 = vmul.f32 %v1416, %v221
  %v1420 = vmul.f32 %v1417, %v219
  %v1421 = vpack.c.bf16 %v1418, %v1418
  %v1422 = vpack.c.bf16 %v1419, %v1419
  %v1423 = vpack.c.bf16 %v1420, %v1420
  %v1427 = vunpack.c.l.b16 %v1421
  %v1428 = vunpack.c.l.b16 %v1422
  %v1429 = vunpack.c.l.b16 %v1423
  %v1430 = vpack.c.b16 %v1428, %v1427
  %v1431 = vpack.c.b16 %v1429, %v1429
  %1432 = vrot.lane.b32.xlu0 %v1430, 17
  %v1433 = vpop.permute.xlu0 %1432
  %1434 = vrot.lane.b32.xlu0 %v1431, 17
  %v1435 = vpop.permute.xlu0 %1434
  %v1436 = vrot.slane %v1433, 4
  %v1437 = vrot.slane %v1435, 4
  %v1438 = vsel %vm259, %v1436, %v1437
  %v1439 = vsel %vm261, %v1433, %v1438
  %1441 = vst [vmem:[#allocation3 + $0x8] sm:$0xff] %v1439
  %v1442 = vld [vmem:[#allocation2] sm:$0xff]
  %v1443 = vld [vmem:[#allocation2 + $0x8] sm:$0xf]
  %1446 = vrot.lane.b32.xlu0 %v1442, 16
  %v1447 = vpop.permute.xlu0 %1446
  %1448 = vrot.lane.b32.xlu0 %v1443, 16
  %v1449 = vpop.permute.xlu0 %1448
  %v1450 = vrot.slane %v1447, 4
  %v1451 = vrot.slane %v1449, 4
  %v1452 = vsel %vm259, %v1450, %v1451
  %v1453 = vsel %vm342, %v1447, %v1452
  %1455 = vst [vmem:[#allocation3 + $0x10] sm:$0xff] %v1453
  %v1456 = vld [vmem:[#allocation2 + $0x10] sm:$0xff]
  %v1457 = vld [vmem:[#allocation2 + $0x18] sm:$0xf]
  %1460 = vrot.lane.b32.xlu0 %v1456, 16
  %v1461 = vpop.permute.xlu0 %1460
  %1462 = vrot.lane.b32.xlu0 %v1457, 16
  %v1463 = vpop.permute.xlu0 %1462
  %v1464 = vrot.slane %v1461, 4
  %v1465 = vrot.slane %v1463, 4
  %v1466 = vsel %vm259, %v1464, %v1465
  %v1467 = vsel %vm342, %v1461, %v1466
  %1469 = vst [vmem:[#allocation3 + $0x18] sm:$0xff] %v1467
  %v1470 = vld [vmem:[#allocation2] sm:$0xff]
  %v1471 = vld [vmem:[#allocation2 + $0x8] sm:$0xf]
  %v1472 = vunpack.c.l.bf16 %v1470
  %v1473 = vunpack.c.h.bf16 %v1470
  %v1474 = vunpack.c.l.bf16 %v1471
  %v1475 = vmul.f32 %v1472, %v389
  %v1476 = vmul.f32 %v1473, %v393
  %v1477 = vmul.f32 %v1474, %v391
  %v1478 = vpack.c.bf16 %v1475, %v1475
  %v1479 = vpack.c.bf16 %v1476, %v1476
  %v1480 = vpack.c.bf16 %v1477, %v1477
  %v1484 = vunpack.c.l.b16 %v1478
  %v1485 = vunpack.c.l.b16 %v1479
  %v1486 = vunpack.c.l.b16 %v1480
  %v1487 = vpack.c.b16 %v1485, %v1484
  %v1488 = vpack.c.b16 %v1486, %v1486
  %1489 = vrot.lane.b32.xlu0 %v1487, 15
  %v1490 = vpop.permute.xlu0 %1489
  %1491 = vrot.lane.b32.xlu0 %v1488, 15
  %v1492 = vpop.permute.xlu0 %1491
  %v1493 = vrot.slane %v1490, 4
  %v1494 = vrot.slane %v1492, 4
  %v1495 = vsel %vm259, %v1493, %v1494
  %v1496 = vsel %vm432, %v1490, %v1495
  %1498 = vst [vmem:[#allocation3 + $0x20] sm:$0xff] %v1496
  %v1499 = vld [vmem:[#allocation2 + $0x10] sm:$0xff]
  %v1500 = vld [vmem:[#allocation2 + $0x18] sm:$0xf]
  %v1501 = vunpack.c.l.bf16 %v1499
  %v1502 = vunpack.c.h.bf16 %v1499
  %v1503 = vunpack.c.l.bf16 %v1500
  %v1504 = vmul.f32 %v1501, %v389
  %v1505 = vmul.f32 %v1502, %v393
  %v1506 = vmul.f32 %v1503, %v391
  %v1507 = vpack.c.bf16 %v1504, %v1504
  %v1508 = vpack.c.bf16 %v1505, %v1505
  %v1509 = vpack.c.bf16 %v1506, %v1506
  %v1513 = vunpack.c.l.b16 %v1507
  %v1514 = vunpack.c.l.b16 %v1508
  %v1515 = vunpack.c.l.b16 %v1509
  %v1516 = vpack.c.b16 %v1514, %v1513
  %v1517 = vpack.c.b16 %v1515, %v1515
  %1518 = vrot.lane.b32.xlu0 %v1516, 15
  %v1519 = vpop.permute.xlu0 %1518
  %1520 = vrot.lane.b32.xlu0 %v1517, 15
  %v1521 = vpop.permute.xlu0 %1520
  %v1522 = vrot.slane %v1519, 4
  %v1523 = vrot.slane %v1521, 4
  %v1524 = vsel %vm259, %v1522, %v1523
  %v1525 = vsel %vm432, %v1519, %v1524
  %1527 = vst [vmem:[#allocation3 + $0x28] sm:$0xff] %v1525
  %v1528 = vld [vmem:[#allocation2] sm:$0xff]
  %v1529 = vld [vmem:[#allocation2 + $0x8] sm:$0xf]
  %v1530 = vunpack.c.l.bf16 %v1528
  %v1531 = vunpack.c.h.bf16 %v1528
  %v1532 = vunpack.c.l.bf16 %v1529
  %v1533 = vmul.f32 %v1530, %v503
  %v1534 = vmul.f32 %v1531, %v507
  %v1535 = vmul.f32 %v1532, %v505
  %v1536 = vpack.c.bf16 %v1533, %v1533
  %v1537 = vpack.c.bf16 %v1534, %v1534
  %v1538 = vpack.c.bf16 %v1535, %v1535
  %v1542 = vunpack.c.l.b16 %v1536
  %v1543 = vunpack.c.l.b16 %v1537
  %v1544 = vunpack.c.l.b16 %v1538
  %v1545 = vpack.c.b16 %v1543, %v1542
  %v1546 = vpack.c.b16 %v1544, %v1544
  %1547 = vrot.lane.b32.xlu0 %v1545, 1
  %v1548 = vpop.permute.xlu0 %1547
  %1549 = vrot.lane.b32.xlu0 %v1546, 1
  %v1550 = vpop.permute.xlu0 %1549
  %v1551 = vrot.slane %v1548, 4
  %v1552 = vrot.slane %v1550, 4
  %v1553 = vsel %vm259, %v1551, %v1552
  %v1554 = vsel %vm546, %v1548, %v1553
  %1556 = vst [vmem:[#allocation3 + $0x30] sm:$0xff] %v1554
  %v1557 = vld [vmem:[#allocation2 + $0x10] sm:$0xff]
  %v1558 = vld [vmem:[#allocation2 + $0x18] sm:$0xf]
  %v1559 = vunpack.c.l.bf16 %v1557
  %v1560 = vunpack.c.h.bf16 %v1557
  %v1561 = vunpack.c.l.bf16 %v1558
  %v1562 = vmul.f32 %v1559, %v503
  %v1563 = vmul.f32 %v1560, %v507
  %v1564 = vmul.f32 %v1561, %v505
  %v1565 = vpack.c.bf16 %v1562, %v1562
  %v1566 = vpack.c.bf16 %v1563, %v1563
  %v1567 = vpack.c.bf16 %v1564, %v1564
  %v1571 = vunpack.c.l.b16 %v1565
  %v1572 = vunpack.c.l.b16 %v1566
  %v1573 = vunpack.c.l.b16 %v1567
  %v1574 = vpack.c.b16 %v1572, %v1571
  %v1575 = vpack.c.b16 %v1573, %v1573
  %1576 = vrot.lane.b32.xlu0 %v1574, 1
  %v1577 = vpop.permute.xlu0 %1576
  %1578 = vrot.lane.b32.xlu0 %v1575, 1
  %v1579 = vpop.permute.xlu0 %1578
  %v1580 = vrot.slane %v1577, 4
  %v1581 = vrot.slane %v1579, 4
  %v1582 = vsel %vm259, %v1580, %v1581
  %v1583 = vsel %vm546, %v1577, %v1582
  %1585 = vst [vmem:[#allocation3 + $0x38] sm:$0xff] %v1583
  %v1586 = vld [vmem:[#allocation2 + $0x4] sm:$0xff]
  %1587 = vst [vmem:[#allocation3 + $0x40] sm:$0xff] %v1586
  %v1588 = vld [vmem:[#allocation2 + $0x14] sm:$0xff]
  %1589 = vst [vmem:[#allocation3 + $0x48] sm:$0xff] %v1588
  %v1590 = vld [vmem:[#allocation2 + $0x4] sm:$0xff]
  %v1591 = vld [vmem:[#allocation2 + $0xc] sm:$0xf]
  %v1592 = vunpack.c.l.bf16 %v1590
  %v1593 = vunpack.c.h.bf16 %v1590
  %v1594 = vunpack.c.l.bf16 %v1591
  %v1595 = vmul.f32 %v1592, %v625
  %v1596 = vmul.f32 %v1593, %v629
  %v1597 = vmul.f32 %v1594, %v627
  %v1598 = vpack.c.bf16 %v1595, %v1595
  %v1599 = vpack.c.bf16 %v1596, %v1596
  %v1600 = vpack.c.bf16 %v1597, %v1597
  %v1604 = vunpack.c.l.b16 %v1598
  %v1605 = vunpack.c.l.b16 %v1599
  %v1606 = vunpack.c.l.b16 %v1600
  %v1607 = vpack.c.b16 %v1605, %v1604
  %v1608 = vpack.c.b16 %v1606, %v1606
  %1609 = vrot.lane.b32.xlu0 %v1607, 127
  %v1610 = vpop.permute.xlu0 %1609
  %1611 = vrot.lane.b32.xlu0 %v1608, 127
  %v1612 = vpop.permute.xlu0 %1611
  %v1613 = vrot.slane %v1610, 4
  %v1614 = vrot.slane %v1612, 4
  %v1615 = vsel %vm259, %v1613, %v1614
  %v1616 = vsel %vm668, %v1610, %v1615
  %1618 = vst [vmem:[#allocation3 + $0x50] sm:$0xff] %v1616
  %v1619 = vld [vmem:[#allocation2 + $0x14] sm:$0xff]
  %v1620 = vld [vmem:[#allocation2 + $0x1c] sm:$0xf]
  %v1621 = vunpack.c.l.bf16 %v1619
  %v1622 = vunpack.c.h.bf16 %v1619
  %v1623 = vunpack.c.l.bf16 %v1620
  %v1624 = vmul.f32 %v1621, %v625
  %v1625 = vmul.f32 %v1622, %v629
  %v1626 = vmul.f32 %v1623, %v627
  %v1627 = vpack.c.bf16 %v1624, %v1624
  %v1628 = vpack.c.bf16 %v1625, %v1625
  %v1629 = vpack.c.bf16 %v1626, %v1626
  %v1633 = vunpack.c.l.b16 %v1627
  %v1634 = vunpack.c.l.b16 %v1628
  %v1635 = vunpack.c.l.b16 %v1629
  %v1636 = vpack.c.b16 %v1634, %v1633
  %v1637 = vpack.c.b16 %v1635, %v1635
  %1638 = vrot.lane.b32.xlu0 %v1636, 127
  %v1639 = vpop.permute.xlu0 %1638
  %1640 = vrot.lane.b32.xlu0 %v1637, 127
  %v1641 = vpop.permute.xlu0 %1640
  %v1642 = vrot.slane %v1639, 4
  %v1643 = vrot.slane %v1641, 4
  %v1644 = vsel %vm259, %v1642, %v1643
  %v1645 = vsel %vm668, %v1639, %v1644
  %1647 = vst [vmem:[#allocation3 + $0x58] sm:$0xff] %v1645
  %v1648 = vld [vmem:[#allocation2 + $0x4] sm:$0xff]
  %v1649 = vld [vmem:[#allocation2 + $0xc] sm:$0xf]
  %v1650 = vunpack.c.l.bf16 %v1648
  %v1651 = vunpack.c.h.bf16 %v1648
  %v1652 = vunpack.c.l.bf16 %v1649
  %v1653 = vmul.f32 %v1650, %v739
  %v1654 = vmul.f32 %v1651, %v743
  %v1655 = vmul.f32 %v1652, %v741
  %v1656 = vpack.c.bf16 %v1653, %v1653
  %v1657 = vpack.c.bf16 %v1654, %v1654
  %v1658 = vpack.c.bf16 %v1655, %v1655
  %v1662 = vunpack.c.l.b16 %v1656
  %v1663 = vunpack.c.l.b16 %v1657
  %v1664 = vunpack.c.l.b16 %v1658
  %v1665 = vpack.c.b16 %v1663, %v1662
  %v1666 = vpack.c.b16 %v1664, %v1664
  %1667 = vrot.lane.b32.xlu0 %v1665, 113
  %v1668 = vpop.permute.xlu0 %1667
  %1669 = vrot.lane.b32.xlu0 %v1666, 113
  %v1670 = vpop.permute.xlu0 %1669
  %v1671 = vrot.slane %v1668, 4
  %v1672 = vrot.slane %v1670, 4
  %v1673 = vsel %vm259, %v1671, %v1672
  %v1674 = vsel %vm782, %v1668, %v1673
  %1676 = vst [vmem:[#allocation3 + $0x60] sm:$0xff] %v1674
  %v1677 = vld [vmem:[#allocation2 + $0x14] sm:$0xff]
  %v1678 = vld [vmem:[#allocation2 + $0x1c] sm:$0xf]
  %v1679 = vunpack.c.l.bf16 %v1677
  %v1680 = vunpack.c.h.bf16 %v1677
  %v1681 = vunpack.c.l.bf16 %v1678
  %v1682 = vmul.f32 %v1679, %v739
  %v1683 = vmul.f32 %v1680, %v743
  %v1684 = vmul.f32 %v1681, %v741
  %v1685 = vpack.c.bf16 %v1682, %v1682
  %v1686 = vpack.c.bf16 %v1683, %v1683
  %v1687 = vpack.c.bf16 %v1684, %v1684
  %v1691 = vunpack.c.l.b16 %v1685
  %v1692 = vunpack.c.l.b16 %v1686
  %v1693 = vunpack.c.l.b16 %v1687
  %v1694 = vpack.c.b16 %v1692, %v1691
  %v1695 = vpack.c.b16 %v1693, %v1693
  %1696 = vrot.lane.b32.xlu0 %v1694, 113
  %v1697 = vpop.permute.xlu0 %1696
  %1698 = vrot.lane.b32.xlu0 %v1695, 113
  %v1699 = vpop.permute.xlu0 %1698
  %v1700 = vrot.slane %v1697, 4
  %v1701 = vrot.slane %v1699, 4
  %v1702 = vsel %vm259, %v1700, %v1701
  %v1703 = vsel %vm782, %v1697, %v1702
  %1705 = vst [vmem:[#allocation3 + $0x68] sm:$0xff] %v1703
  %v1706 = vld [vmem:[#allocation2 + $0x4] sm:$0xff]
  %v1707 = vld [vmem:[#allocation2 + $0xc] sm:$0xf]
  %1710 = vrot.lane.b32.xlu0 %v1706, 112
  %v1711 = vpop.permute.xlu0 %1710
  %1712 = vrot.lane.b32.xlu0 %v1707, 112
  %v1713 = vpop.permute.xlu0 %1712
  %v1714 = vrot.slane %v1711, 4
  %v1715 = vrot.slane %v1713, 4
  %v1716 = vsel %vm259, %v1714, %v1715
  %v1717 = vsel %vm863, %v1711, %v1716
  %1719 = vst [vmem:[#allocation3 + $0x70] sm:$0xff] %v1717
  %v1720 = vld [vmem:[#allocation2 + $0x14] sm:$0xff]
  %v1721 = vld [vmem:[#allocation2 + $0x1c] sm:$0xf]
  %1724 = vrot.lane.b32.xlu0 %v1720, 112
  %v1725 = vpop.permute.xlu0 %1724
  %1726 = vrot.lane.b32.xlu0 %v1721, 112
  %v1727 = vpop.permute.xlu0 %1726
  %v1728 = vrot.slane %v1725, 4
  %v1729 = vrot.slane %v1727, 4
  %v1730 = vsel %vm259, %v1728, %v1729
  %v1731 = vsel %vm863, %v1725, %v1730
  %1733 = vst [vmem:[#allocation3 + $0x78] sm:$0xff] %v1731
  %v1734 = vld [vmem:[#allocation2 + $0x4] sm:$0xff]
  %v1735 = vld [vmem:[#allocation2 + $0xc] sm:$0xf]
  %v1736 = vunpack.c.l.bf16 %v1734
  %v1737 = vunpack.c.h.bf16 %v1734
  %v1738 = vunpack.c.l.bf16 %v1735
  %v1739 = vmul.f32 %v1736, %v910
  %v1740 = vmul.f32 %v1737, %v914
  %v1741 = vmul.f32 %v1738, %v912
  %v1742 = vpack.c.bf16 %v1739, %v1739
  %v1743 = vpack.c.bf16 %v1740, %v1740
  %v1744 = vpack.c.bf16 %v1741, %v1741
  %v1748 = vunpack.c.l.b16 %v1742
  %v1749 = vunpack.c.l.b16 %v1743
  %v1750 = vunpack.c.l.b16 %v1744
  %v1751 = vpack.c.b16 %v1749, %v1748
  %v1752 = vpack.c.b16 %v1750, %v1750
  %1753 = vrot.lane.b32.xlu0 %v1751, 111
  %v1754 = vpop.permute.xlu0 %1753
  %1755 = vrot.lane.b32.xlu0 %v1752, 111
  %v1756 = vpop.permute.xlu0 %1755
  %v1757 = vrot.slane %v1754, 4
  %v1758 = vrot.slane %v1756, 4
  %v1759 = vsel %vm259, %v1757, %v1758
  %v1760 = vsel %vm953, %v1754, %v1759
  %1762 = vst [vmem:[#allocation3 + $0x80] sm:$0xff] %v1760
  %v1763 = vld [vmem:[#allocation2 + $0x14] sm:$0xff]
  %v1764 = vld [vmem:[#allocation2 + $0x1c] sm:$0xf]
  %v1765 = vunpack.c.l.bf16 %v1763
  %v1766 = vunpack.c.h.bf16 %v1763
  %v1767 = vunpack.c.l.bf16 %v1764
  %v1768 = vmul.f32 %v1765, %v910
  %v1769 = vmul.f32 %v1766, %v914
  %v1770 = vmul.f32 %v1767, %v912
  %v1771 = vpack.c.bf16 %v1768, %v1768
  %v1772 = vpack.c.bf16 %v1769, %v1769
  %v1773 = vpack.c.bf16 %v1770, %v1770
  %v1777 = vunpack.c.l.b16 %v1771
  %v1778 = vunpack.c.l.b16 %v1772
  %v1779 = vunpack.c.l.b16 %v1773
  %v1780 = vpack.c.b16 %v1778, %v1777
  %v1781 = vpack.c.b16 %v1779, %v1779
  %1782 = vrot.lane.b32.xlu0 %v1780, 111
  %v1783 = vpop.permute.xlu0 %1782
  %1784 = vrot.lane.b32.xlu0 %v1781, 111
  %v1785 = vpop.permute.xlu0 %1784
  %v1786 = vrot.slane %v1783, 4
  %v1787 = vrot.slane %v1785, 4
  %v1788 = vsel %vm259, %v1786, %v1787
  %v1789 = vsel %vm953, %v1783, %v1788
  %1791 = vst [vmem:[#allocation3 + $0x88] sm:$0xff] %v1789
  %v1792 = vld [vmem:[%s8] sm:$0xff]
  %v1793 = vld [vmem:[%s8 + $0x8] sm:$0xff]
  %v1794 = vld [vmem:[#allocation3] sm:$0xff]
  %v1795 = vld [vmem:[#allocation3 + $0x8] sm:$0xff]
  %v1796 = vld [vmem:[#allocation3 + $0x10] sm:$0xff]
  %v1797 = vld [vmem:[#allocation3 + $0x18] sm:$0xff]
  %v1798 = vld [vmem:[#allocation3 + $0x20] sm:$0xff]
  %v1799 = vld [vmem:[#allocation3 + $0x28] sm:$0xff]
  %v1800 = vld [vmem:[#allocation3 + $0x30] sm:$0xff]
  %v1801 = vld [vmem:[#allocation3 + $0x38] sm:$0xff]
  %v1802 = vld [vmem:[#allocation3 + $0x40] sm:$0xff]
  %v1803 = vld [vmem:[#allocation3 + $0x48] sm:$0xff]
  %v1804 = vld [vmem:[#allocation3 + $0x50] sm:$0xff]
  %v1805 = vld [vmem:[#allocation3 + $0x58] sm:$0xff]
  %v1806 = vld [vmem:[#allocation3 + $0x60] sm:$0xff]
  %v1807 = vld [vmem:[#allocation3 + $0x68] sm:$0xff]
  %v1808 = vld [vmem:[#allocation3 + $0x70] sm:$0xff]
  %v1809 = vld [vmem:[#allocation3 + $0x78] sm:$0xff]
  %v1810 = vld [vmem:[#allocation3 + $0x80] sm:$0xff]
  %v1811 = vld [vmem:[#allocation3 + $0x88] sm:$0xff]
  %v1812 = vpack.c.bf16 %v1793, %v1792
  %v1831 = vunpack.c.l.b16 %v1794
  %v1832 = vunpack.c.h.b16 %v1794
  %v1833 = vunpack.c.l.b16 %v1795
  %v1834 = vunpack.c.h.b16 %v1795
  %v1835 = vunpack.c.l.b16 %v1796
  %v1836 = vunpack.c.h.b16 %v1796
  %v1837 = vunpack.c.l.b16 %v1797
  %v1838 = vunpack.c.h.b16 %v1797
  %v1839 = vunpack.c.l.b16 %v1798
  %v1840 = vunpack.c.h.b16 %v1798
  %v1841 = vunpack.c.l.b16 %v1799
  %v1842 = vunpack.c.h.b16 %v1799
  %v1843 = vunpack.c.l.b16 %v1800
  %v1844 = vunpack.c.h.b16 %v1800
  %v1845 = vunpack.c.l.b16 %v1801
  %v1846 = vunpack.c.h.b16 %v1801
  %v1847 = vunpack.c.l.b16 %v1802
  %v1848 = vunpack.c.h.b16 %v1802
  %v1849 = vunpack.c.l.b16 %v1803
  %v1850 = vunpack.c.h.b16 %v1803
  %v1851 = vunpack.c.l.b16 %v1804
  %v1852 = vunpack.c.h.b16 %v1804
  %v1853 = vunpack.c.l.b16 %v1805
  %v1854 = vunpack.c.h.b16 %v1805
  %v1855 = vunpack.c.l.b16 %v1806
  %v1856 = vunpack.c.h.b16 %v1806
  %v1857 = vunpack.c.l.b16 %v1807
  %v1858 = vunpack.c.h.b16 %v1807
  %v1859 = vunpack.c.l.b16 %v1808
  %v1860 = vunpack.c.h.b16 %v1808
  %v1861 = vunpack.c.l.b16 %v1809
  %v1862 = vunpack.c.h.b16 %v1809
  %v1863 = vunpack.c.l.b16 %v1810
  %v1864 = vunpack.c.h.b16 %v1810
  %v1865 = vunpack.c.l.b16 %v1811
  %v1866 = vunpack.c.h.b16 %v1811
  %v1867 = vpack.c.b16 %v1835, %v1831
  %v1868 = vpack.c.b16 %v1836, %v1832
  %v1869 = vpack.c.b16 %v1837, %v1833
  %v1870 = vpack.c.b16 %v1838, %v1834
  %v1871 = vpack.c.b16 %v1843, %v1839
  %v1872 = vpack.c.b16 %v1844, %v1840
  %v1873 = vpack.c.b16 %v1845, %v1841
  %v1874 = vpack.c.b16 %v1846, %v1842
  %v1875 = vpack.c.b16 %v1851, %v1847
  %v1876 = vpack.c.b16 %v1852, %v1848
  %v1877 = vpack.c.b16 %v1853, %v1849
  %v1878 = vpack.c.b16 %v1854, %v1850
  %v1879 = vpack.c.b16 %v1859, %v1855
  %v1880 = vpack.c.b16 %v1860, %v1856
  %v1881 = vpack.c.b16 %v1861, %v1857
  %v1882 = vpack.c.b16 %v1862, %v1858
  %v1883 = vpack.c.b16 %v1863, %v1863
  %v1884 = vpack.c.b16 %v1864, %v1864
  %v1885 = vpack.c.b16 %v1865, %v1865
  %v1886 = vpack.c.b16 %v1866, %v1866
  %vm1903 = vcmask 588800
  %v1905 = vsel %vm1903, %v1812, 0
  %vm1907 = vcmask 1043456
  %v1909 = vsel %vm1907, %v1883, 0
  %v1912 = vsel %vm1907, %v1884, 0
  %v1915 = vsel %vm1907, %v1885, 0
  %v1918 = vsel %vm1907, %v1886, 0
  %1920 = vmatprep.subr.bf16.mxu0 0
  %1921 = vmatpush1.bf16.msra.mxu0 0
  %1922 = vmatprep.subr.bf16.mxu0 0
  %1923 = vmatpush1.bf16.msra.mxu0 0
  %1924 = vmatprep.subr.bf16.mxu0 0
  %1925 = vmatpush1.bf16.msra.mxu0 0
  %1926 = vmatprep.subr.bf16.mxu0 %v1912
  %1927 = vmatpush1.bf16.msra.mxu0 %v1909
  %1928 = vmatprep.subr.bf16.mxu0 %v1880
  %1929 = vmatpush1.bf16.msra.mxu0 %v1879
  %1930 = vmatprep.subr.bf16.mxu0 %v1876
  %1931 = vmatpush1.bf16.msra.mxu0 %v1875
  %1932 = vmatprep.subr.bf16.mxu0 %v1872
  %1933 = vmatpush1.bf16.msra.mxu0 %v1871
  %1934 = vmatprep.subr.bf16.mxu0 %v1868
  %1935 = vmatpush1.bf16.msra.mxu0 %v1867
  %1936 = vmatprep.subr.bf16.mxu0 0
  %1937 = vmatpush2.bf16.msra.mxu0 0
  %1938 = vmatprep.subr.bf16.mxu0 0
  %1939 = vmatpush2.bf16.msra.mxu0 0
  %1940 = vmatprep.subr.bf16.mxu0 0
  %1941 = vmatpush2.bf16.msra.mxu0 0
  %1942 = vmatprep.subr.bf16.mxu0 0
  %1943 = vmatpush2.bf16.msra.mxu0 0
  %1944 = vmatprep.subr.bf16.mxu0 0
  %1945 = vmatpush2.bf16.msra.mxu0 0
  %1946 = vmatprep.subr.bf16.mxu0 0
  %1947 = vmatpush2.bf16.msra.mxu0 0
  %1948 = vmatprep.subr.bf16.mxu0 0
  %1949 = vmatpush2.bf16.msra.mxu0 0
  %1950 = vmatprep.subr.bf16.mxu0 0
  %1951 = vmatpush2.bf16.msra.mxu0 0
  %1952 = vmatprep.mubr.bf16.mxu0 0
  %1953 = vmatmul.mubr.bf16.gmra.mxu0 %v1905
  %v1954 = vpop.f32.mrf.mxu0
  %v1955 = vadd.f32 0.0, %v1954
  %v1956 = vpop.f32.mrf.mxu0
  %v1957 = vadd.f32 0.0, %v1956
  %v1958 = vpop.f32.mrf.mxu0
  %v1959 = vadd.f32 0.0, %v1958
  %v1960 = vpop.f32.mrf.mxu0
  %v1961 = vadd.f32 0.0, %v1960
  %1962 = vdwg.mxu0
  %1963 = vmatprep.subr.bf16.mxu0 0
  %1964 = vmatpush1.bf16.msra.mxu0 0
  %1965 = vmatprep.subr.bf16.mxu0 0
  %1966 = vmatpush1.bf16.msra.mxu0 0
  %1967 = vmatprep.subr.bf16.mxu0 0
  %1968 = vmatpush1.bf16.msra.mxu0 0
  %1969 = vmatprep.subr.bf16.mxu0 %v1918
  %1970 = vmatpush1.bf16.msra.mxu0 %v1915
  %1971 = vmatprep.subr.bf16.mxu0 %v1882
  %1972 = vmatpush1.bf16.msra.mxu0 %v1881
  %1973 = vmatprep.subr.bf16.mxu0 %v1878
  %1974 = vmatpush1.bf16.msra.mxu0 %v1877
  %1975 = vmatprep.subr.bf16.mxu0 %v1874
  %1976 = vmatpush1.bf16.msra.mxu0 %v1873
  %1977 = vmatprep.subr.bf16.mxu0 %v1870
  %1978 = vmatpush1.bf16.msra.mxu0 %v1869
  %1979 = vmatprep.subr.bf16.mxu0 0
  %1980 = vmatpush2.bf16.msra.mxu0 0
  %1981 = vmatprep.subr.bf16.mxu0 0
  %1982 = vmatpush2.bf16.msra.mxu0 0
  %1983 = vmatprep.subr.bf16.mxu0 0
  %1984 = vmatpush2.bf16.msra.mxu0 0
  %1985 = vmatprep.subr.bf16.mxu0 0
  %1986 = vmatpush2.bf16.msra.mxu0 0
  %1987 = vmatprep.subr.bf16.mxu0 0
  %1988 = vmatpush2.bf16.msra.mxu0 0
  %1989 = vmatprep.subr.bf16.mxu0 0
  %1990 = vmatpush2.bf16.msra.mxu0 0
  %1991 = vmatprep.subr.bf16.mxu0 0
  %1992 = vmatpush2.bf16.msra.mxu0 0
  %1993 = vmatprep.subr.bf16.mxu0 0
  %1994 = vmatpush2.bf16.msra.mxu0 0
  %1995 = vmatprep.mubr.bf16.mxu0 0
  %1996 = vmatmul.mubr.bf16.gmra.mxu0 %v1905
  %v1997 = vpop.f32.mrf.mxu0
  %v1998 = vadd.f32 0.0, %v1997
  %v1999 = vpop.f32.mrf.mxu0
  %v2000 = vadd.f32 0.0, %v1999
  %v2001 = vpop.f32.mrf.mxu0
  %v2002 = vadd.f32 0.0, %v2001
  %v2003 = vpop.f32.mrf.mxu0
  %v2004 = vadd.f32 0.0, %v2003
  %2005 = vdwg.mxu0
  %v2006 = vld [vmem:[%s9] sm:$0xff]
  %v2007 = vld [vmem:[%s9 + $0x8] sm:$0xff]
  %v2008 = vld [vmem:[%s10] sm:$0xff]
  %v2009 = vld [vmem:[%s10 + $0x8] sm:$0xff]
  %v2010 = vadd.f32 %v1955, %v1957
  %v2011 = vadd.f32 %v2010, %v1998
  %v2012 = vadd.f32 %v2011, %v2000
  %2013 = vadd.xlane.f32.xlu0 %v2012
  %v2014 = vpop.xlane.xlu0 %2013
  %v2015 = vadd.f32 %v1959, %v1961
  %v2016 = vadd.f32 %v2015, %v2002
  %v2017 = vadd.f32 %v2016, %v2004
  %2018 = vadd.xlane.f32.xlu0 %v2017
  %v2019 = vpop.xlane.xlu0 %2018
  %v2020 = vmul.f32 %v2014, 0.001953125
  %v2021 = vmul.f32 %v2019, 0.001953125
  %v2022 = vmul.f32 %v1955, %v1955
  %v2023 = vmul.f32 %v1957, %v1957
  %v2024 = vmul.f32 %v1998, %v1998
  %v2025 = vmul.f32 %v2000, %v2000
  %v2026 = vmul.f32 %v1959, %v1959
  %v2027 = vmul.f32 %v1961, %v1961
  %v2028 = vmul.f32 %v2002, %v2002
  %v2029 = vmul.f32 %v2004, %v2004
  %v2030 = vadd.f32 %v2022, %v2023
  %v2031 = vadd.f32 %v2030, %v2024
  %v2032 = vadd.f32 %v2031, %v2025
  %2033 = vadd.xlane.f32.xlu0 %v2032
  %v2034 = vpop.xlane.xlu0 %2033
  %v2035 = vadd.f32 %v2026, %v2027
  %v2036 = vadd.f32 %v2035, %v2028
  %v2037 = vadd.f32 %v2036, %v2029
  %2038 = vadd.xlane.f32.xlu0 %v2037
  %v2039 = vpop.xlane.xlu0 %2038
  %v2040 = vmul.f32 %v2034, 0.001953125
  %v2041 = vmul.f32 %v2039, 0.001953125
  %v2042 = vmul.f32 %v2020, %v2020
  %v2043 = vmul.f32 %v2021, %v2021
  %v2044 = vsub.f32 %v2040, %v2042
  %v2045 = vsub.f32 %v2041, %v2043
  %v2046 = vadd.f32 %v2044, 1e-05
  %v2047 = vadd.f32 %v2045, 1e-05
  %v2048 = vrsqrt.pop %v2046
  %v2049 = vrsqrt.pop %v2047
  %v2050 = vmul.f32 %v2006, %v2048
  %v2051 = vmul.f32 %v2007, %v2049
  %v2052 = vmul.f32 %v2020, %v2050
  %v2053 = vmul.f32 %v2021, %v2051
  %v2054 = vsub.f32 %v2008, %v2052
  %v2055 = vsub.f32 %v2009, %v2053
  %2057 = vset.pattern.permute.xlu0 0
  %2058 = vperm.xlu0 %2057, %v2050
  %v2059 = vpop.permute.xlu0 %2058
  %2062 = vset.pattern.permute.xlu0 0
  %2063 = vperm.xlu0 %2062, %v2051
  %v2064 = vpop.permute.xlu0 %2063
  %v2066 = vmul.f32 %v1955, %v2059
  %v2067 = vmul.f32 %v1957, %v2059
  %v2068 = vmul.f32 %v1998, %v2059
  %v2069 = vmul.f32 %v2000, %v2059
  %v2070 = vmul.f32 %v1959, %v2064
  %v2071 = vmul.f32 %v1961, %v2064
  %v2072 = vmul.f32 %v2002, %v2064
  %v2073 = vmul.f32 %v2004, %v2064
  %2075 = vset.pattern.permute.xlu0 0
  %2076 = vperm.xlu0 %2075, %v2054
  %v2077 = vpop.permute.xlu0 %2076
  %2080 = vset.pattern.permute.xlu0 0
  %2081 = vperm.xlu0 %2080, %v2055
  %v2082 = vpop.permute.xlu0 %2081
  %v2084 = vadd.f32 %v2066, %v2077
  %v2085 = vadd.f32 %v2067, %v2077
  %v2086 = vadd.f32 %v2068, %v2077
  %v2087 = vadd.f32 %v2069, %v2077
  %v2088 = vadd.f32 %v2070, %v2082
  %v2089 = vadd.f32 %v2071, %v2082
  %v2090 = vadd.f32 %v2072, %v2082
  %v2091 = vadd.f32 %v2073, %v2082
  %v2092 = vmax.f32 %v2084, 0.0
  %v2093 = vmax.f32 %v2085, 0.0
  %v2094 = vmax.f32 %v2086, 0.0
  %v2095 = vmax.f32 %v2087, 0.0
  %v2096 = vmax.f32 %v2088, 0.0
  %v2097 = vmax.f32 %v2089, 0.0
  %v2098 = vmax.f32 %v2090, 0.0
  %v2099 = vmax.f32 %v2091, 0.0
  %2100 = vst [vmem:[%s11] sm:$0xff] %v2092
  %2101 = vst [vmem:[%s11 + $0x8] sm:$0xff] %v2093
  %2102 = vst [vmem:[%s11 + $0x10] sm:$0xff] %v2096
  %2103 = vst [vmem:[%s11 + $0x18] sm:$0xff] %v2097
  %s2104 = scalar_lea.vmem %s11, 32
  %2105 = vst [vmem:[%s2104] sm:$0xff] %v2094
  %2106 = vst [vmem:[%s2104 + $0x8] sm:$0xff] %v2095
  %2107 = vst [vmem:[%s2104 + $0x10] sm:$0xff] %v2098
  %2108 = vst [vmem:[%s2104 + $0x18] sm:$0xff] %v2099
  // Predicated region
  $region46: #{up_forward.1} parent=0 // pred_check
    _
  $region47: #{up_forward.1} parent=0 // pred_check_branch
    %2110 = sbr.rel (0) target = $region49
  $region48: #{up_forward.1} parent=0 // pred_region
    _
  $region49: #{up_forward.1} parent=0 // pred_fallthru
    _
  // Predicated region
  $region50: #{up_forward.1} parent=0 // pred_check
    _
  $region51: #{up_forward.1} parent=0 // pred_check_branch
    %2112 = sbr.rel (0) target = $region53
  $region52: #{up_forward.1} parent=0 // pred_region
    _
  $region53: #{up_forward.1} parent=0 // pred_fallthru
    _

</llo_original>
